<compile_context>
chip_gen: v7x
topology: tpu7x:2x2x1
jax: 0.10.0
libtpu: 0.0.40
codegen_flags: <defaults>
</compile_context>

<pallas_src>
import functools
import warnings

import jax
import jax.numpy as jnp
from jax import lax
from jax.experimental import pallas as pl
from jax.experimental.pallas import tpu as pltpu


def _mlp_embed_kernel(x_ref, w1_ref, b1_ref, w2_ref, b2_ref, o_ref):
    # In-kernel cast of the streamed f32 x tile to bf16 (VPU; hidden under the MXU).
    x = x_ref[...].astype(jnp.bfloat16)

    # fc1: bf16 MXU matmul, f32 accumulation; bias + ReLU in f32.
    h = jnp.dot(x, w1_ref[...], preferred_element_type=jnp.float32)
    h = jnp.maximum(h + b1_ref[...], 0.0)

    # dropout1(p=0.2): identity in eval/inference mode.
    # TODO(synk): training-mode dropout (pltpu.prng_seed + prng_random_bits mask) not emitted.

    # fc2: activations back to bf16 for the MXU, f32 accumulation.
    y = jnp.dot(h.astype(w2_ref.dtype), w2_ref[...], preferred_element_type=jnp.float32)
    y = y + b2_ref[...]

    # F.normalize(p=2, dim=1): y / max(||y||, 1e-12) == y * rsqrt(max(||y||^2, 1e-24)).
    # Padded output lanes carry zero weights/bias, so they do not perturb the norm.
    sq = jnp.sum(y * y, axis=1, keepdims=True)
    inv = lax.rsqrt(jnp.maximum(sq, 1e-24))
    o_ref[...] = (y * inv).astype(o_ref.dtype)


def _choose_tiling(B):
    """Pick (tile_b, B_pad) for the batch axis.

    128-row minimum tiles (full MXU M-dim on v5e, full sublane occupancy for the bf16
    cast).  Multi-step grids use 256-row tiles so per-step overhead is amortized and a
    B_pad that is a multiple of 512 gives an even step count for v7x megacore sharding.
    """
    B_pad = -(-B // 128) * 128
    if B_pad <= 256:
        return B_pad, B_pad                  # single grid step
    if B_pad % 256 == 0:
        return 256, B_pad                    # 256-row steps (even count when B_pad % 512 == 0)
    return 128, B_pad                        # keep padding minimal: 128-row steps


def _resident_spec(shape):
    """Spec for a grid-invariant operand (weights/biases): constant index_map,
    single-buffered so a constant block does not waste 2x VMEM on double-buffering."""
    index_map = lambda *idx: (0,) * len(shape)
    try:
        return pl.BlockSpec(shape, index_map, pipeline_mode=pl.Buffered(buffer_count=1))
    except (TypeError, ValueError) as e:  # older jax: no pipeline_mode on BlockSpec
        warnings.warn(
            "pl.Buffered(1) unsupported on this jax version; grid-invariant operand of "
            f"shape {shape} falls back to default double-buffering (2x VMEM): {e!r}")
        return pl.BlockSpec(shape, index_map)


def make_movie_embedding_forward(w1_t, b1, w2_t, b2, *, out_dtype=jnp.float32):
    """Build the eval-mode forward of MovieEmbeddingNetwork.

    Weights are pre-transposed to (in, out): w1_t (D_in, 512), w2_t (512, E); biases
    b1 (512,), b2 (E,).  The one-time weight cast/pad is done here (hoisted out of the
    per-call path); the returned callable takes x (B, D_in) f32 and returns (B, E)
    row-wise L2-normalized embeddings in `out_dtype` (f32 by default; pass bf16 if the
    consumer accepts it to halve the dominant output HBM stream).
    """
    w1_t = jnp.asarray(w1_t)
    w2_t = jnp.asarray(w2_t)
    b1 = jnp.asarray(b1)
    b2 = jnp.asarray(b2)
    D_in, H = w1_t.shape
    H2, E = w2_t.shape
    assert H2 == H and b1.shape == (H,) and b2.shape == (E,)
    E_pad = max(128, -(-E // 128) * 128)
    out_dtype = jnp.dtype(out_dtype)

    # --- one-time weight preprocessing (bf16 weights, f32 biases, lane-padded E) ---
    w1_p = w1_t.astype(jnp.bfloat16)
    w2_p = jnp.zeros((H, E_pad), jnp.bfloat16).at[:, :E].set(w2_t.astype(jnp.bfloat16))
    b1_p = b1.reshape(1, H).astype(jnp.float32)
    b2_p = jnp.zeros((1, E_pad), jnp.float32).at[:, :E].set(b2.reshape(1, E).astype(jnp.float32))

    def _fwd(x, w1_p, b1_p, w2_p, b2_p):
        B, D = x.shape
        assert D == D_in, f"expected input_dim={D_in}, got {D}"
        tile_b, B_pad = _choose_tiling(B)

        x_p = x.astype(jnp.float32)
        if B_pad != B:
            x_p = jnp.pad(x_p, ((0, B_pad - B), (0, 0)))

        # Explicit VMEM budget: resident weights/biases + double-buffered x/out streams.
        resident = w1_p.size * 2 + w2_p.size * 2 + (b1_p.size + b2_p.size) * 4
        streams = 2 * tile_b * D * 4 + 2 * tile_b * E_pad * out_dtype.itemsize
        vmem_limit = int(max(resident + streams + (4 << 20), 32 << 20))
        # TODO(synk): if resident weights approach ~48 MiB (v7x has only 64 MiB physical
        # VMEM), split D_in over a K grid axis with an f32 VMEM accumulator
        # (pl.when init/finalize) instead of keeping W1^T fully resident.

        out = pl.pallas_call(
            _mlp_embed_kernel,
            out_shape=jax.ShapeDtypeStruct((B_pad, E_pad), out_dtype),
            grid_spec=pltpu.PrefetchScalarGridSpec(
                num_scalar_prefetch=0,
                grid=(B_pad // tile_b,),
                in_specs=[
                    pl.BlockSpec((tile_b, D), lambda i: (i, 0)),  # x tile (f32 stream)
                    _resident_spec((D, H)),                       # W1^T  (bf16, resident)
                    _resident_spec((1, H)),                       # b1    (f32)
                    _resident_spec((H, E_pad)),                   # W2^T  (bf16, resident)
                    _resident_spec((1, E_pad)),                   # b2    (f32)
                ],
                out_specs=pl.BlockSpec((tile_b, E_pad), lambda i: (i, 0)),
            ),
            compiler_params=pltpu.CompilerParams(
                dimension_semantics=("parallel",),   # megacore-shard batch tiles on v7x
                vmem_limit_bytes=vmem_limit,
            ),
        )(x_p, w1_p, b1_p, w2_p, b2_p)

        if B_pad != B or E_pad != E:
            out = out[:B, :E]
        return out

    jitted = jax.jit(_fwd)

    def forward(x):
        return jitted(x, w1_p, b1_p, w2_p, b2_p)

    return forward


def _init_params(key, input_dim, hidden=512, embedding_dim=512):
    """Deterministic init mimicking nn.Linear default (uniform +/- 1/sqrt(fan_in)),
    stored pre-transposed as (in, out)."""
    k1, k2, k3, k4 = jax.random.split(key, 4)
    bound1 = 1.0 / jnp.sqrt(input_dim)
    bound2 = 1.0 / jnp.sqrt(hidden)
    w1_t = jax.random.uniform(k1, (input_dim, hidden), jnp.float32, -bound1, bound1)
    b1 = jax.random.uniform(k2, (hidden,), jnp.float32, -bound1, bound1)
    w2_t = jax.random.uniform(k3, (hidden, embedding_dim), jnp.float32, -bound2, bound2)
    b2 = jax.random.uniform(k4, (embedding_dim,), jnp.float32, -bound2, bound2)
    return w1_t, b1, w2_t, b2


def _reference_f32(x, w1_t, b1, w2_t, b2):
    h = jnp.maximum(x @ w1_t + b1, 0.0)
    y = h @ w2_t + b2
    n = jnp.sqrt(jnp.sum(y * y, axis=1, keepdims=True))
    return y / jnp.maximum(n, 1e-12)


def _reference_bf16(x, w1_t, b1, w2_t, b2):
    """Precision-matched reference (bf16 matmul inputs, f32 accumulation)."""
    xb = x.astype(jnp.bfloat16)
    w1b = w1_t.astype(jnp.bfloat16)
    w2b = w2_t.astype(jnp.bfloat16)
    h = jnp.maximum(jnp.dot(xb, w1b, preferred_element_type=jnp.float32) + b1, 0.0)
    y = jnp.dot(h.astype(jnp.bfloat16), w2b, preferred_element_type=jnp.float32) + b2
    sq = jnp.sum(y * y, axis=1, keepdims=True)
    return y * lax.rsqrt(jnp.maximum(sq, 1e-24))


if __name__ == "__main__":
    # Shapes consistent with the module: hidden fixed at 512 by fc1, embedding_dim=512
    # (module default), small input_dim.  B=50 exercises batch padding to a single
    # 128-row tile; B=512 exercises the multi-step (2 x 256-row, megacore-even) grid.
    D_IN, HIDDEN, EMB = 128, 512, 512

    key = jax.random.PRNGKey(0)
    kx1, kx2, kp = jax.random.split(key, 3)
    w1_t, b1, w2_t, b2 = _init_params(kp, D_IN, HIDDEN, EMB)

    forward = make_movie_embedding_forward(w1_t, b1, w2_t, b2)

    for B, kx in ((50, kx1), (512, kx2)):
        x = jax.random.normal(kx, (B, D_IN), jnp.float32)
        out = jax.block_until_ready(forward(x))
        assert out.shape == (B, EMB)
        assert bool(jnp.all(jnp.isfinite(out)))

        ref_bf = _reference_bf16(x, w1_t, b1, w2_t, b2)
        ref_f32 = _reference_f32(x, w1_t, b1, w2_t, b2)
        # Precision-matched reference: tight agreement.
        assert jnp.allclose(out, ref_bf, atol=5e-3, rtol=5e-3), "mismatch vs bf16-matched ref"
        # Full-f32 reference: loose tolerance accounts for bf16 weight/activation rounding.
        assert jnp.allclose(out, ref_f32, atol=2e-2, rtol=2e-2), "mismatch vs f32 reference"
        # Rows should be unit-norm (normalization is done in f32 inside the kernel).
        assert jnp.allclose(jnp.linalg.norm(out, axis=1), 1.0, atol=1e-4)

    print("KERNEL_OK")
</pallas_src>

<mosaic_0001>
module attributes {stable_mosaic.version = 11 : i64} {
  func.func @_mlp_embed_kernel(%arg0: i32, %arg1: memref<128x128xf32, #tpu.memory_space<vmem>>, %arg2: memref<128x512xbf16, #tpu.memory_space<vmem>>, %arg3: memref<1x512xf32, #tpu.memory_space<vmem>>, %arg4: memref<512x512xbf16, #tpu.memory_space<vmem>>, %arg5: memref<1x512xf32, #tpu.memory_space<vmem>>, %arg6: memref<128x512xf32, #tpu.memory_space<vmem>>) attributes {dimension_semantics = [#tpu.dimension_semantics<parallel>], iteration_bounds = array<i64: 1>, scalar_prefetch = 0 : i64, scratch_operands = 0 : i64, tpu.core_type = #tpu.core_type<tc>, window_params = [{transform_indices = @transform_0, window_bounds = array<i64: 128, 128>}, {pipeline_mode = #tpu.pipeline_mode<synchronous>, transform_indices = @transform_1, window_bounds = array<i64: 128, 512>}, {pipeline_mode = #tpu.pipeline_mode<synchronous>, transform_indices = @transform_2, window_bounds = array<i64: 1, 512>}, {pipeline_mode = #tpu.pipeline_mode<synchronous>, transform_indices = @transform_3, window_bounds = array<i64: 512, 512>}, {pipeline_mode = #tpu.pipeline_mode<synchronous>, transform_indices = @transform_4, window_bounds = array<i64: 1, 512>}, {transform_indices = @transform_5, window_bounds = array<i64: 128, 512>}]} {
    %c0 = arith.constant 0 : index
    %c0_0 = arith.constant 0 : index
    %0 = vector.load %arg1[%c0, %c0_0] : memref<128x128xf32, #tpu.memory_space<vmem>>, vector<128x128xf32>
    %1 = arith.truncf %0 : vector<128x128xf32> to vector<128x128xbf16>
    %c0_1 = arith.constant 0 : index
    %c0_2 = arith.constant 0 : index
    %2 = vector.load %arg2[%c0_1, %c0_2] : memref<128x512xbf16, #tpu.memory_space<vmem>>, vector<128x512xbf16>
    %cst = arith.constant dense<0.000000e+00> : vector<128x512xf32>
    %3 = tpu.matmul %1, %2, %cst {dimension_numbers = #tpu.dot_dimension_numbers<[1], [0], [0], [1], [0, 0, 1, 1], [], []>} : vector<128x128xbf16>, vector<128x512xbf16>, vector<128x512xf32> -> vector<128x512xf32>
    %c0_3 = arith.constant 0 : index
    %c0_4 = arith.constant 0 : index
    %4 = vector.load %arg3[%c0_3, %c0_4] : memref<1x512xf32, #tpu.memory_space<vmem>>, vector<1x512xf32>
    %5 = vector.broadcast %4 : vector<1x512xf32> to vector<128x512xf32>
    %6 = arith.addf %3, %5 : vector<128x512xf32>
    %cst_5 = arith.constant 0.000000e+00 : f32
    %7 = vector.broadcast %cst_5 : f32 to vector<128x512xf32>
    %8 = arith.maximumf %6, %7 : vector<128x512xf32>
    %9 = arith.truncf %8 : vector<128x512xf32> to vector<128x512xbf16>
    %c0_6 = arith.constant 0 : index
    %c0_7 = arith.constant 0 : index
    %10 = vector.load %arg4[%c0_6, %c0_7] : memref<512x512xbf16, #tpu.memory_space<vmem>>, vector<512x512xbf16>
    %cst_8 = arith.constant dense<0.000000e+00> : vector<128x512xf32>
    %11 = tpu.matmul %9, %10, %cst_8 {dimension_numbers = #tpu.dot_dimension_numbers<[1], [0], [0], [1], [0, 0, 1, 1], [], []>} : vector<128x512xbf16>, vector<512x512xbf16>, vector<128x512xf32> -> vector<128x512xf32>
    %c0_9 = arith.constant 0 : index
    %c0_10 = arith.constant 0 : index
    %12 = vector.load %arg5[%c0_9, %c0_10] : memref<1x512xf32, #tpu.memory_space<vmem>>, vector<1x512xf32>
    %13 = vector.broadcast %12 : vector<1x512xf32> to vector<128x512xf32>
    %14 = arith.addf %11, %13 : vector<128x512xf32>
    %15 = arith.mulf %14, %14 : vector<128x512xf32>
    %cst_11 = arith.constant dense<0.000000e+00> : vector<128xf32>
    %16 = vector.multi_reduction <add>, %15, %cst_11 [1] : vector<128x512xf32> to vector<128xf32>
    %17 = vector.shape_cast %16 : vector<128xf32> to vector<128x1xf32>
    %cst_12 = arith.constant 1.000000e-24 : f32
    %18 = vector.broadcast %cst_12 : f32 to vector<128x1xf32>
    %19 = arith.maximumf %17, %18 : vector<128x1xf32>
    %20 = math.rsqrt %19 : vector<128x1xf32>
    %21 = vector.broadcast %20 : vector<128x1xf32> to vector<128x512xf32>
    %22 = arith.mulf %14, %21 : vector<128x512xf32>
    %c0_13 = arith.constant 0 : index
    %c0_14 = arith.constant 0 : index
    %23 = vector.load %arg6[%c0_13, %c0_14] : memref<128x512xf32, #tpu.memory_space<vmem>>, vector<128x512xf32>
    tpu.vector_store %arg6[%c0_13, %c0_14], %22 {strides = array<i32>} : memref<128x512xf32, #tpu.memory_space<vmem>>, vector<128x512xf32>,
    return
  }
  func.func @transform_0(%arg0: i32) -> (i32, i32) {
    %c0_i32 = arith.constant 0 : i32
    %c0_i32_0 = arith.constant 0 : i32
    return %arg0, %c0_i32 : i32, i32
  }
  func.func @transform_1(%arg0: i32) -> (i32, i32) {
    %c0_i32 = arith.constant 0 : i32
    %c0_i32_0 = arith.constant 0 : i32
    %c0_i32_1 = arith.constant 0 : i32
    return %c0_i32, %c0_i32_0 : i32, i32
  }
  func.func @transform_2(%arg0: i32) -> (i32, i32) {
    %c0_i32 = arith.constant 0 : i32
    %c0_i32_0 = arith.constant 0 : i32
    %c0_i32_1 = arith.constant 0 : i32
    return %c0_i32, %c0_i32_0 : i32, i32
  }
  func.func @transform_3(%arg0: i32) -> (i32, i32) {
    %c0_i32 = arith.constant 0 : i32
    %c0_i32_0 = arith.constant 0 : i32
    %c0_i32_1 = arith.constant 0 : i32
    return %c0_i32, %c0_i32_0 : i32, i32
  }
  func.func @transform_4(%arg0: i32) -> (i32, i32) {
    %c0_i32 = arith.constant 0 : i32
    %c0_i32_0 = arith.constant 0 : i32
    %c0_i32_1 = arith.constant 0 : i32
    return %c0_i32, %c0_i32_0 : i32, i32
  }
  func.func @transform_5(%arg0: i32) -> (i32, i32) {
    %c0_i32 = arith.constant 0 : i32
    %c0_i32_0 = arith.constant 0 : i32
    return %arg0, %c0_i32 : i32, i32
  }
}

</mosaic_0001>

<llo_original>
// kernel: _fwd.1
$region0: #{_fwd.1}
  #allocation0 [shape = 'u32[]', space=smem, size = 0x4, offset = 0x4, fixed_abs, tag = 'smem constant byte address 0x4 - core index']
  #allocation1 [shape = 'u32[144,128]{1,0:T(1,128)}', space=vmem, size = 0x12000, scoped, tag = 'internal scratch']
  %s0 = inlined_call_operand.vmem [shape: f32[128,128], index: 0, kind: input, shape index: {}]
  %s1 = inlined_call_operand.hbm [shape: bf16[128,512], index: 1, kind: input, shape index: {}]
  %s2 = inlined_call_operand.vmem [shape: f32[1,512], index: 2, kind: input, shape index: {}]
  %s3 = inlined_call_operand.hbm [shape: bf16[512,512], index: 3, kind: input, shape index: {}]
  %s4 = inlined_call_operand.vmem [shape: f32[1,512], index: 4, kind: input, shape index: {}]
  %s5 = inlined_call_operand.vmem [shape: f32[128,512], index: 5, kind: output, shape index: {}]
  %s6 = sld [smem:[#allocation0]]
  $region38: #{_fwd.1} parent=0
    _
  %s8 = ssub.s32 1, %s6
  %s9 = scalar_select 0, %s8, %s6
  $region1: #{_fwd.1} parent=0
    #allocation2 [shape = 'u8[131072]{0}', space=vmem, size = 0x20000, scoped, tag = 'input window, operand 1, single buffered']
    #allocation3 [shape = 's32[1]{0}', space=sflag, size = 0x4, scoped, tag = 'scoped memory for _fwd.1']
    #allocation4 [shape = 'u8[524288]{0}', space=vmem, size = 0x80000, scoped, tag = 'input window, operand 3, single buffered']
    #allocation5 [shape = 's32[1]{0}', space=sflag, size = 0x4, scoped, tag = 'scoped memory for _fwd.1']
    %10 = vsyncpa [#allocation3], 0
    %11 = vsyncpa [#allocation5], 0
    // Predicated region
    $region2: #{_fwd.1} parent=1 // pred_check
      _
    $region3: #{_fwd.1} parent=1 // pred_check_branch
      %13 = sbr.rel (0) target = $region5
    $region4: #{_fwd.1} parent=1 // pred_region
      _
    $region5: #{_fwd.1} parent=1 // pred_fallthru
      _
    // Predicated region
    $region6: #{_fwd.1} parent=1 // pred_check
      _
    $region7: #{_fwd.1} parent=1 // pred_check_branch
      %15 = sbr.rel (0) target = $region9
    $region8: #{_fwd.1} parent=1 // pred_region
      %s17 = ssub.s32 4096, 4096
      %18 = vsyncadd [#allocation3], %s17
      %s19 = sshll.u32 [#allocation2], 4
      %s20 = int_to_ptr.vmem [resolvable:$true] %s19
      %25 = dma.hbm_to_vmem [thread:$0]  %s1, 4096, %s20, [#allocation3], 256, 256, 16
    $region9: #{_fwd.1} parent=1 // pred_fallthru
      _
    // Predicated region
    $region10: #{_fwd.1} parent=1 // pred_check
      _
    $region11: #{_fwd.1} parent=1 // pred_check_branch
      %27 = sbr.rel (0) target = $region13
    $region12: #{_fwd.1} parent=1 // pred_region
      _
    $region13: #{_fwd.1} parent=1 // pred_fallthru
      _
    // Predicated region
    $region14: #{_fwd.1} parent=1 // pred_check
      _
    $region15: #{_fwd.1} parent=1 // pred_check_branch
      %29 = sbr.rel (0) target = $region17
    $region16: #{_fwd.1} parent=1 // pred_region
      %s31 = ssub.s32 16384, 16384
      %32 = vsyncadd [#allocation5], %s31
      %s33 = sshll.u32 [#allocation4], 4
      %s34 = int_to_ptr.vmem [resolvable:$true] %s33
      %39 = dma.hbm_to_vmem [thread:$0]  %s3, 16384, %s34, [#allocation5], 256, 256, 16
    $region17: #{_fwd.1} parent=1 // pred_fallthru
      _
    // Predicated region
    $region18: #{_fwd.1} parent=1 // pred_check
      _
    $region19: #{_fwd.1} parent=1 // pred_check_branch
      %41 = sbr.rel (0) target = $region21
    $region20: #{_fwd.1} parent=1 // pred_region
      _
    $region21: #{_fwd.1} parent=1 // pred_fallthru
      _
    // Predicated region
    $region22: #{_fwd.1} parent=1 // pred_check
      _
    $region23: #{_fwd.1} parent=1 // pred_check_branch
      %43 = sbr.rel (0) target = $region25
    $region24: #{_fwd.1} parent=1 // pred_region
      %44 = dma.done [#allocation3], 4096
    $region25: #{_fwd.1} parent=1 // pred_fallthru
      _
    // Predicated region
    $region26: #{_fwd.1} parent=1 // pred_check
      _
    $region27: #{_fwd.1} parent=1 // pred_check_branch
      %46 = sbr.rel (0) target = $region29
    $region28: #{_fwd.1} parent=1 // pred_region
      %47 = dma.done [#allocation5], 16384
    $region29: #{_fwd.1} parent=1 // pred_fallthru
      _
    %v49 = vld [vmem:[%s0] sm:$0xff]
    %v50 = vld [vmem:[%s0 + $0x8] sm:$0xff]
    %v51 = vld [vmem:[%s0 + $0x10] sm:$0xff]
    %v52 = vld [vmem:[%s0 + $0x18] sm:$0xff]
    %v53 = vld [vmem:[%s0 + $0x20] sm:$0xff]
    %v54 = vld [vmem:[%s0 + $0x28] sm:$0xff]
    %v55 = vld [vmem:[%s0 + $0x30] sm:$0xff]
    %v56 = vld [vmem:[%s0 + $0x38] sm:$0xff]
    %v57 = vld [vmem:[%s0 + $0x40] sm:$0xff]
    %v58 = vld [vmem:[%s0 + $0x48] sm:$0xff]
    %v59 = vld [vmem:[%s0 + $0x50] sm:$0xff]
    %v60 = vld [vmem:[%s0 + $0x58] sm:$0xff]
    %v61 = vld [vmem:[%s0 + $0x60] sm:$0xff]
    %v62 = vld [vmem:[%s0 + $0x68] sm:$0xff]
    %v63 = vld [vmem:[%s0 + $0x70] sm:$0xff]
    %v64 = vld [vmem:[%s0 + $0x78] sm:$0xff]
    %v65 = vpack.c.bf16 %v50, %v49
    %v66 = vpack.c.bf16 %v52, %v51
    %v67 = vpack.c.bf16 %v54, %v53
    %v68 = vpack.c.bf16 %v56, %v55
    %v69 = vpack.c.bf16 %v58, %v57
    %v70 = vpack.c.bf16 %v60, %v59
    %v71 = vpack.c.bf16 %v62, %v61
    %v72 = vpack.c.bf16 %v64, %v63
    %v73 = vld [vmem:[#allocation2] sm:$0xff]
    %v74 = vld [vmem:[#allocation2 + $0x8] sm:$0xff]
    %v75 = vld [vmem:[#allocation2 + $0x10] sm:$0xff]
    %v76 = vld [vmem:[#allocation2 + $0x18] sm:$0xff]
    %v77 = vld [vmem:[#allocation2 + $0x20] sm:$0xff]
    %v78 = vld [vmem:[#allocation2 + $0x28] sm:$0xff]
    %v79 = vld [vmem:[#allocation2 + $0x30] sm:$0xff]
    %v80 = vld [vmem:[#allocation2 + $0x38] sm:$0xff]
    %v81 = vld [vmem:[#allocation2 + $0x40] sm:$0xff]
    %v82 = vld [vmem:[#allocation2 + $0x48] sm:$0xff]
    %v83 = vld [vmem:[#allocation2 + $0x50] sm:$0xff]
    %v84 = vld [vmem:[#allocation2 + $0x58] sm:$0xff]
    %v85 = vld [vmem:[#allocation2 + $0x60] sm:$0xff]
    %v86 = vld [vmem:[#allocation2 + $0x68] sm:$0xff]
    %v87 = vld [vmem:[#allocation2 + $0x70] sm:$0xff]
    %v88 = vld [vmem:[#allocation2 + $0x78] sm:$0xff]
    %v89 = vld [vmem:[#allocation2 + $0x80] sm:$0xff]
    %v90 = vld [vmem:[#allocation2 + $0x88] sm:$0xff]
    %v91 = vld [vmem:[#allocation2 + $0x90] sm:$0xff]
    %v92 = vld [vmem:[#allocation2 + $0x98] sm:$0xff]
    %v93 = vld [vmem:[#allocation2 + $0xa0] sm:$0xff]
    %v94 = vld [vmem:[#allocation2 + $0xa8] sm:$0xff]
    %v95 = vld [vmem:[#allocation2 + $0xb0] sm:$0xff]
    %v96 = vld [vmem:[#allocation2 + $0xb8] sm:$0xff]
    %v97 = vld [vmem:[#allocation2 + $0xc0] sm:$0xff]
    %v98 = vld [vmem:[#allocation2 + $0xc8] sm:$0xff]
    %v99 = vld [vmem:[#allocation2 + $0xd0] sm:$0xff]
    %v100 = vld [vmem:[#allocation2 + $0xd8] sm:$0xff]
    %v101 = vld [vmem:[#allocation2 + $0xe0] sm:$0xff]
    %v102 = vld [vmem:[#allocation2 + $0xe8] sm:$0xff]
    %v103 = vld [vmem:[#allocation2 + $0xf0] sm:$0xff]
    %v104 = vld [vmem:[#allocation2 + $0xf8] sm:$0xff]
    %v105 = vld [vmem:[%s2] sm:$0xf]
    %v107 = vlaneseq
    %v108 = vshrl.u32 %v107, 7
    %v109 = vsub.s32 0, %v108
    %v110 = vrot.slane %v105, %v109
    %v111 = vlaneseq
    %v112 = vshrl.u32 %v111, 7
    %v113 = vsub.s32 1, %v112
    %v114 = vrot.slane %v105, %v113
    %v115 = vlaneseq
    %v116 = vshrl.u32 %v115, 7
    %v117 = vsub.s32 2, %v116
    %v118 = vrot.slane %v105, %v117
    %v119 = vlaneseq
    %v120 = vshrl.u32 %v119, 7
    %v121 = vsub.s32 3, %v120
    %v122 = vrot.slane %v105, %v121
    %v159 = vunpack.c.l.b16 %v73
    %v160 = vunpack.c.h.b16 %v73
    %v161 = vunpack.c.l.b16 %v74
    %v162 = vunpack.c.h.b16 %v74
    %v163 = vunpack.c.l.b16 %v75
    %v164 = vunpack.c.h.b16 %v75
    %v165 = vunpack.c.l.b16 %v76
    %v166 = vunpack.c.h.b16 %v76
    %v167 = vunpack.c.l.b16 %v77
    %v168 = vunpack.c.h.b16 %v77
    %v169 = vunpack.c.l.b16 %v78
    %v170 = vunpack.c.h.b16 %v78
    %v171 = vunpack.c.l.b16 %v79
    %v172 = vunpack.c.h.b16 %v79
    %v173 = vunpack.c.l.b16 %v80
    %v174 = vunpack.c.h.b16 %v80
    %v175 = vunpack.c.l.b16 %v81
    %v176 = vunpack.c.h.b16 %v81
    %v177 = vunpack.c.l.b16 %v82
    %v178 = vunpack.c.h.b16 %v82
    %v179 = vunpack.c.l.b16 %v83
    %v180 = vunpack.c.h.b16 %v83
    %v181 = vunpack.c.l.b16 %v84
    %v182 = vunpack.c.h.b16 %v84
    %v183 = vunpack.c.l.b16 %v85
    %v184 = vunpack.c.h.b16 %v85
    %v185 = vunpack.c.l.b16 %v86
    %v186 = vunpack.c.h.b16 %v86
    %v187 = vunpack.c.l.b16 %v87
    %v188 = vunpack.c.h.b16 %v87
    %v189 = vunpack.c.l.b16 %v88
    %v190 = vunpack.c.h.b16 %v88
    %v191 = vunpack.c.l.b16 %v89
    %v192 = vunpack.c.h.b16 %v89
    %v193 = vunpack.c.l.b16 %v90
    %v194 = vunpack.c.h.b16 %v90
    %v195 = vunpack.c.l.b16 %v91
    %v196 = vunpack.c.h.b16 %v91
    %v197 = vunpack.c.l.b16 %v92
    %v198 = vunpack.c.h.b16 %v92
    %v199 = vunpack.c.l.b16 %v93
    %v200 = vunpack.c.h.b16 %v93
    %v201 = vunpack.c.l.b16 %v94
    %v202 = vunpack.c.h.b16 %v94
    %v203 = vunpack.c.l.b16 %v95
    %v204 = vunpack.c.h.b16 %v95
    %v205 = vunpack.c.l.b16 %v96
    %v206 = vunpack.c.h.b16 %v96
    %v207 = vunpack.c.l.b16 %v97
    %v208 = vunpack.c.h.b16 %v97
    %v209 = vunpack.c.l.b16 %v98
    %v210 = vunpack.c.h.b16 %v98
    %v211 = vunpack.c.l.b16 %v99
    %v212 = vunpack.c.h.b16 %v99
    %v213 = vunpack.c.l.b16 %v100
    %v214 = vunpack.c.h.b16 %v100
    %v215 = vunpack.c.l.b16 %v101
    %v216 = vunpack.c.h.b16 %v101
    %v217 = vunpack.c.l.b16 %v102
    %v218 = vunpack.c.h.b16 %v102
    %v219 = vunpack.c.l.b16 %v103
    %v220 = vunpack.c.h.b16 %v103
    %v221 = vunpack.c.l.b16 %v104
    %v222 = vunpack.c.h.b16 %v104
    %v223 = vpack.c.b16 %v163, %v159
    %v224 = vpack.c.b16 %v164, %v160
    %v225 = vpack.c.b16 %v165, %v161
    %v226 = vpack.c.b16 %v166, %v162
    %v227 = vpack.c.b16 %v171, %v167
    %v228 = vpack.c.b16 %v172, %v168
    %v229 = vpack.c.b16 %v173, %v169
    %v230 = vpack.c.b16 %v174, %v170
    %v231 = vpack.c.b16 %v179, %v175
    %v232 = vpack.c.b16 %v180, %v176
    %v233 = vpack.c.b16 %v181, %v177
    %v234 = vpack.c.b16 %v182, %v178
    %v235 = vpack.c.b16 %v187, %v183
    %v236 = vpack.c.b16 %v188, %v184
    %v237 = vpack.c.b16 %v189, %v185
    %v238 = vpack.c.b16 %v190, %v186
    %v239 = vpack.c.b16 %v195, %v191
    %v240 = vpack.c.b16 %v196, %v192
    %v241 = vpack.c.b16 %v197, %v193
    %v242 = vpack.c.b16 %v198, %v194
    %v243 = vpack.c.b16 %v203, %v199
    %v244 = vpack.c.b16 %v204, %v200
    %v245 = vpack.c.b16 %v205, %v201
    %v246 = vpack.c.b16 %v206, %v202
    %v247 = vpack.c.b16 %v211, %v207
    %v248 = vpack.c.b16 %v212, %v208
    %v249 = vpack.c.b16 %v213, %v209
    %v250 = vpack.c.b16 %v214, %v210
    %v251 = vpack.c.b16 %v219, %v215
    %v252 = vpack.c.b16 %v220, %v216
    %v253 = vpack.c.b16 %v221, %v217
    %v254 = vpack.c.b16 %v222, %v218
    %287 = vmatprep.subr.bf16.mxu0 %v224
    %288 = vmatpush1.bf16.msra.mxu0 %v223
    %289 = vmatprep.subr.bf16.mxu0 %v228
    %290 = vmatpush1.bf16.msra.mxu0 %v227
    %291 = vmatprep.subr.bf16.mxu0 %v232
    %292 = vmatpush1.bf16.msra.mxu0 %v231
    %293 = vmatprep.subr.bf16.mxu0 %v236
    %294 = vmatpush1.bf16.msra.mxu0 %v235
    %295 = vmatprep.subr.bf16.mxu0 %v240
    %296 = vmatpush1.bf16.msra.mxu0 %v239
    %297 = vmatprep.subr.bf16.mxu0 %v244
    %298 = vmatpush1.bf16.msra.mxu0 %v243
    %299 = vmatprep.subr.bf16.mxu0 %v248
    %300 = vmatpush1.bf16.msra.mxu0 %v247
    %301 = vmatprep.subr.bf16.mxu0 %v252
    %302 = vmatpush1.bf16.msra.mxu0 %v251
    %303 = vmatprep.subr.bf16.mxu0 0
    %304 = vmatpush1.bf16.msra.mxu0 0
    %305 = vmatprep.subr.bf16.mxu0 0
    %306 = vmatpush1.bf16.msra.mxu0 0
    %307 = vmatprep.subr.bf16.mxu0 0
    %308 = vmatpush1.bf16.msra.mxu0 0
    %309 = vmatprep.subr.bf16.mxu0 0
    %310 = vmatpush1.bf16.msra.mxu0 0
    %311 = vmatprep.subr.bf16.mxu0 0
    %312 = vmatpush1.bf16.msra.mxu0 0
    %313 = vmatprep.subr.bf16.mxu0 0
    %314 = vmatpush1.bf16.msra.mxu0 0
    %315 = vmatprep.subr.bf16.mxu0 0
    %316 = vmatpush1.bf16.msra.mxu0 0
    %317 = vmatprep.subr.bf16.mxu0 0
    %318 = vmatpush1.bf16.msra.mxu0 0
    %319 = vmatprep.mubr.bf16.mxu0 0
    %320 = vmatmul.mubr.bf16.gmra.mrb[0].mxu0 %v65
    %v321 = vpop.f32.mrb[0].mxu0
    %v322 = vadd.f32 %v110, %v321
    %v323 = vpop.f32.mrb[0].mxu0
    %v324 = vadd.f32 %v114, %v323
    %v325 = vpop.f32.mrb[0].mxu0
    %v326 = vadd.f32 %v110, %v325
    %v327 = vpop.f32.mrb[0].mxu0
    %v328 = vadd.f32 %v114, %v327
    %329 = vmatprep.mubr.bf16.mxu0 0
    %330 = vmatmul.mubr.bf16.gmra.mrb[0].mxu0 %v66
    %v331 = vpop.f32.mrb[0].mxu0
    %v332 = vadd.f32 %v110, %v331
    %v333 = vpop.f32.mrb[0].mxu0
    %v334 = vadd.f32 %v114, %v333
    %v335 = vpop.f32.mrb[0].mxu0
    %v336 = vadd.f32 %v110, %v335
    %v337 = vpop.f32.mrb[0].mxu0
    %v338 = vadd.f32 %v114, %v337
    %339 = vmatprep.mubr.bf16.mxu0 0
    %340 = vmatmul.mubr.bf16.gmra.mrb[0].mxu0 %v67
    %v341 = vpop.f32.mrb[0].mxu0
    %v342 = vadd.f32 %v110, %v341
    %v343 = vpop.f32.mrb[0].mxu0
    %v344 = vadd.f32 %v114, %v343
    %v345 = vpop.f32.mrb[0].mxu0
    %v346 = vadd.f32 %v110, %v345
    %v347 = vpop.f32.mrb[0].mxu0
    %v348 = vadd.f32 %v114, %v347
    %349 = vmatprep.mubr.bf16.mxu0 0
    %350 = vmatmul.mubr.bf16.gmra.mrb[0].mxu0 %v68
    %v351 = vpop.f32.mrb[0].mxu0
    %v352 = vadd.f32 %v110, %v351
    %v353 = vpop.f32.mrb[0].mxu0
    %v354 = vadd.f32 %v114, %v353
    %v355 = vpop.f32.mrb[0].mxu0
    %v356 = vadd.f32 %v110, %v355
    %v357 = vpop.f32.mrb[0].mxu0
    %v358 = vadd.f32 %v114, %v357
    %359 = vmatprep.mubr.bf16.mxu0 0
    %360 = vmatmul.mubr.bf16.gmra.mrb[0].mxu0 %v69
    %v361 = vpop.f32.mrb[0].mxu0
    %v362 = vadd.f32 %v110, %v361
    %v363 = vpop.f32.mrb[0].mxu0
    %v364 = vadd.f32 %v114, %v363
    %v365 = vpop.f32.mrb[0].mxu0
    %v366 = vadd.f32 %v110, %v365
    %v367 = vpop.f32.mrb[0].mxu0
    %v368 = vadd.f32 %v114, %v367
    %369 = vmatprep.mubr.bf16.mxu0 0
    %370 = vmatmul.mubr.bf16.gmra.mrb[0].mxu0 %v70
    %v371 = vpop.f32.mrb[0].mxu0
    %v372 = vadd.f32 %v110, %v371
    %v373 = vpop.f32.mrb[0].mxu0
    %v374 = vadd.f32 %v114, %v373
    %v375 = vpop.f32.mrb[0].mxu0
    %v376 = vadd.f32 %v110, %v375
    %v377 = vpop.f32.mrb[0].mxu0
    %v378 = vadd.f32 %v114, %v377
    %379 = vmatprep.mubr.bf16.mxu0 0
    %380 = vmatmul.mubr.bf16.gmra.mrb[0].mxu0 %v71
    %v381 = vpop.f32.mrb[0].mxu0
    %v382 = vadd.f32 %v110, %v381
    %v383 = vpop.f32.mrb[0].mxu0
    %v384 = vadd.f32 %v114, %v383
    %v385 = vpop.f32.mrb[0].mxu0
    %v386 = vadd.f32 %v110, %v385
    %v387 = vpop.f32.mrb[0].mxu0
    %v388 = vadd.f32 %v114, %v387
    %389 = vmatprep.mubr.bf16.mxu0 0
    %390 = vmatmul.mubr.bf16.gmra.mrb[0].mxu0 %v72
    %v391 = vpop.f32.mrb[0].mxu0
    %v392 = vadd.f32 %v110, %v391
    %v393 = vpop.f32.mrb[0].mxu0
    %v394 = vadd.f32 %v114, %v393
    %v395 = vpop.f32.mrb[0].mxu0
    %v396 = vadd.f32 %v110, %v395
    %v397 = vpop.f32.mrb[0].mxu0
    %v398 = vadd.f32 %v114, %v397
    %399 = vdwg.mxu0
    %400 = vmatprep.subr.bf16.mxu0 %v226
    %401 = vmatpush1.bf16.msra.mxu0 %v225
    %402 = vmatprep.subr.bf16.mxu0 %v230
    %403 = vmatpush1.bf16.msra.mxu0 %v229
    %404 = vmatprep.subr.bf16.mxu0 %v234
    %405 = vmatpush1.bf16.msra.mxu0 %v233
    %406 = vmatprep.subr.bf16.mxu0 %v238
    %407 = vmatpush1.bf16.msra.mxu0 %v237
    %408 = vmatprep.subr.bf16.mxu0 %v242
    %409 = vmatpush1.bf16.msra.mxu0 %v241
    %410 = vmatprep.subr.bf16.mxu0 %v246
    %411 = vmatpush1.bf16.msra.mxu0 %v245
    %412 = vmatprep.subr.bf16.mxu0 %v250
    %413 = vmatpush1.bf16.msra.mxu0 %v249
    %414 = vmatprep.subr.bf16.mxu0 %v254
    %415 = vmatpush1.bf16.msra.mxu0 %v253
    %416 = vmatprep.subr.bf16.mxu0 0
    %417 = vmatpush1.bf16.msra.mxu0 0
    %418 = vmatprep.subr.bf16.mxu0 0
    %419 = vmatpush1.bf16.msra.mxu0 0
    %420 = vmatprep.subr.bf16.mxu0 0
    %421 = vmatpush1.bf16.msra.mxu0 0
    %422 = vmatprep.subr.bf16.mxu0 0
    %423 = vmatpush1.bf16.msra.mxu0 0
    %424 = vmatprep.subr.bf16.mxu0 0
    %425 = vmatpush1.bf16.msra.mxu0 0
    %426 = vmatprep.subr.bf16.mxu0 0
    %427 = vmatpush1.bf16.msra.mxu0 0
    %428 = vmatprep.subr.bf16.mxu0 0
    %429 = vmatpush1.bf16.msra.mxu0 0
    %430 = vmatprep.subr.bf16.mxu0 0
    %431 = vmatpush1.bf16.msra.mxu0 0
    %432 = vmatprep.mubr.bf16.mxu0 0
    %433 = vmatmul.mubr.bf16.gmra.mrb[0].mxu0 %v65
    %v434 = vpop.f32.mrb[0].mxu0
    %v435 = vadd.f32 %v118, %v434
    %v436 = vpop.f32.mrb[0].mxu0
    %v437 = vadd.f32 %v122, %v436
    %v438 = vpop.f32.mrb[0].mxu0
    %v439 = vadd.f32 %v118, %v438
    %v440 = vpop.f32.mrb[0].mxu0
    %v441 = vadd.f32 %v122, %v440
    %442 = vmatprep.mubr.bf16.mxu0 0
    %443 = vmatmul.mubr.bf16.gmra.mrb[0].mxu0 %v66
    %v444 = vpop.f32.mrb[0].mxu0
    %v445 = vadd.f32 %v118, %v444
    %v446 = vpop.f32.mrb[0].mxu0
    %v447 = vadd.f32 %v122, %v446
    %v448 = vpop.f32.mrb[0].mxu0
    %v449 = vadd.f32 %v118, %v448
    %v450 = vpop.f32.mrb[0].mxu0
    %v451 = vadd.f32 %v122, %v450
    %452 = vmatprep.mubr.bf16.mxu0 0
    %453 = vmatmul.mubr.bf16.gmra.mrb[0].mxu0 %v67
    %v454 = vpop.f32.mrb[0].mxu0
    %v455 = vadd.f32 %v118, %v454
    %v456 = vpop.f32.mrb[0].mxu0
    %v457 = vadd.f32 %v122, %v456
    %v458 = vpop.f32.mrb[0].mxu0
    %v459 = vadd.f32 %v118, %v458
    %v460 = vpop.f32.mrb[0].mxu0
    %v461 = vadd.f32 %v122, %v460
    %462 = vmatprep.mubr.bf16.mxu0 0
    %463 = vmatmul.mubr.bf16.gmra.mrb[0].mxu0 %v68
    %v464 = vpop.f32.mrb[0].mxu0
    %v465 = vadd.f32 %v118, %v464
    %v466 = vpop.f32.mrb[0].mxu0
    %v467 = vadd.f32 %v122, %v466
    %v468 = vpop.f32.mrb[0].mxu0
    %v469 = vadd.f32 %v118, %v468
    %v470 = vpop.f32.mrb[0].mxu0
    %v471 = vadd.f32 %v122, %v470
    %472 = vmatprep.mubr.bf16.mxu0 0
    %473 = vmatmul.mubr.bf16.gmra.mrb[0].mxu0 %v69
    %v474 = vpop.f32.mrb[0].mxu0
    %v475 = vadd.f32 %v118, %v474
    %v476 = vpop.f32.mrb[0].mxu0
    %v477 = vadd.f32 %v122, %v476
    %v478 = vpop.f32.mrb[0].mxu0
    %v479 = vadd.f32 %v118, %v478
    %v480 = vpop.f32.mrb[0].mxu0
    %v481 = vadd.f32 %v122, %v480
    %482 = vmatprep.mubr.bf16.mxu0 0
    %483 = vmatmul.mubr.bf16.gmra.mrb[0].mxu0 %v70
    %v484 = vpop.f32.mrb[0].mxu0
    %v485 = vadd.f32 %v118, %v484
    %v486 = vpop.f32.mrb[0].mxu0
    %v487 = vadd.f32 %v122, %v486
    %v488 = vpop.f32.mrb[0].mxu0
    %v489 = vadd.f32 %v118, %v488
    %v490 = vpop.f32.mrb[0].mxu0
    %v491 = vadd.f32 %v122, %v490
    %492 = vmatprep.mubr.bf16.mxu0 0
    %493 = vmatmul.mubr.bf16.gmra.mrb[0].mxu0 %v71
    %v494 = vpop.f32.mrb[0].mxu0
    %v495 = vadd.f32 %v118, %v494
    %v496 = vpop.f32.mrb[0].mxu0
    %v497 = vadd.f32 %v122, %v496
    %v498 = vpop.f32.mrb[0].mxu0
    %v499 = vadd.f32 %v118, %v498
    %v500 = vpop.f32.mrb[0].mxu0
    %v501 = vadd.f32 %v122, %v500
    %502 = vmatprep.mubr.bf16.mxu0 0
    %503 = vmatmul.mubr.bf16.gmra.mrb[0].mxu0 %v72
    %v504 = vpop.f32.mrb[0].mxu0
    %v505 = vadd.f32 %v118, %v504
    %v506 = vpop.f32.mrb[0].mxu0
    %v507 = vadd.f32 %v122, %v506
    %v508 = vpop.f32.mrb[0].mxu0
    %v509 = vadd.f32 %v118, %v508
    %v510 = vpop.f32.mrb[0].mxu0
    %v511 = vadd.f32 %v122, %v510
    %512 = vdwg.mxu0
    %v513 = vmax.f32 %v322, 0.0
    %v514 = vmax.f32 %v324, 0.0
    %v515 = vmax.f32 %v435, 0.0
    %v516 = vmax.f32 %v437, 0.0
    %v517 = vmax.f32 %v326, 0.0
    %v518 = vmax.f32 %v328, 0.0
    %v519 = vmax.f32 %v439, 0.0
    %v520 = vmax.f32 %v441, 0.0
    %v521 = vmax.f32 %v332, 0.0
    %v522 = vmax.f32 %v334, 0.0
    %v523 = vmax.f32 %v445, 0.0
    %v524 = vmax.f32 %v447, 0.0
    %v525 = vmax.f32 %v336, 0.0
    %v526 = vmax.f32 %v338, 0.0
    %v527 = vmax.f32 %v449, 0.0
    %v528 = vmax.f32 %v451, 0.0
    %v529 = vmax.f32 %v342, 0.0
    %v530 = vmax.f32 %v344, 0.0
    %v531 = vmax.f32 %v455, 0.0
    %v532 = vmax.f32 %v457, 0.0
    %v533 = vmax.f32 %v346, 0.0
    %v534 = vmax.f32 %v348, 0.0
    %v535 = vmax.f32 %v459, 0.0
    %v536 = vmax.f32 %v461, 0.0
    %v537 = vmax.f32 %v352, 0.0
    %v538 = vmax.f32 %v354, 0.0
    %v539 = vmax.f32 %v465, 0.0
    %v540 = vmax.f32 %v467, 0.0
    %v541 = vmax.f32 %v356, 0.0
    %v542 = vmax.f32 %v358, 0.0
    %v543 = vmax.f32 %v469, 0.0
    %v544 = vmax.f32 %v471, 0.0
    %v545 = vmax.f32 %v362, 0.0
    %v546 = vmax.f32 %v364, 0.0
    %v547 = vmax.f32 %v475, 0.0
    %v548 = vmax.f32 %v477, 0.0
    %v549 = vmax.f32 %v366, 0.0
    %v550 = vmax.f32 %v368, 0.0
    %v551 = vmax.f32 %v479, 0.0
    %v552 = vmax.f32 %v481, 0.0
    %v553 = vmax.f32 %v372, 0.0
    %v554 = vmax.f32 %v374, 0.0
    %v555 = vmax.f32 %v485, 0.0
    %v556 = vmax.f32 %v487, 0.0
    %v557 = vmax.f32 %v376, 0.0
    %v558 = vmax.f32 %v378, 0.0
    %v559 = vmax.f32 %v489, 0.0
    %v560 = vmax.f32 %v491, 0.0
    %v561 = vmax.f32 %v382, 0.0
    %v562 = vmax.f32 %v384, 0.0
    %v563 = vmax.f32 %v495, 0.0
    %v564 = vmax.f32 %v497, 0.0
    %v565 = vmax.f32 %v386, 0.0
    %v566 = vmax.f32 %v388, 0.0
    %v567 = vmax.f32 %v499, 0.0
    %v568 = vmax.f32 %v501, 0.0
    %v569 = vmax.f32 %v392, 0.0
    %v570 = vmax.f32 %v394, 0.0
    %v571 = vmax.f32 %v505, 0.0
    %v572 = vmax.f32 %v507, 0.0
    %v573 = vmax.f32 %v396, 0.0
    %v574 = vmax.f32 %v398, 0.0
    %v575 = vmax.f32 %v509, 0.0
    %v576 = vmax.f32 %v511, 0.0
    %v577 = vpack.c.bf16 %v517, %v513
    %v578 = vpack.c.bf16 %v518, %v514
    %v579 = vpack.c.bf16 %v519, %v515
    %v580 = vpack.c.bf16 %v520, %v516
    %v581 = vpack.c.bf16 %v525, %v521
    %v582 = vpack.c.bf16 %v526, %v522
    %v583 = vpack.c.bf16 %v527, %v523
    %v584 = vpack.c.bf16 %v528, %v524
    %v585 = vpack.c.bf16 %v533, %v529
    %v586 = vpack.c.bf16 %v534, %v530
    %v587 = vpack.c.bf16 %v535, %v531
    %v588 = vpack.c.bf16 %v536, %v532
    %v589 = vpack.c.bf16 %v541, %v537
    %v590 = vpack.c.bf16 %v542, %v538
    %v591 = vpack.c.bf16 %v543, %v539
    %v592 = vpack.c.bf16 %v544, %v540
    %v593 = vpack.c.bf16 %v549, %v545
    %v594 = vpack.c.bf16 %v550, %v546
    %v595 = vpack.c.bf16 %v551, %v547
    %v596 = vpack.c.bf16 %v552, %v548
    %v597 = vpack.c.bf16 %v557, %v553
    %v598 = vpack.c.bf16 %v558, %v554
    %v599 = vpack.c.bf16 %v559, %v555
    %v600 = vpack.c.bf16 %v560, %v556
    %v601 = vpack.c.bf16 %v565, %v561
    %v602 = vpack.c.bf16 %v566, %v562
    %v603 = vpack.c.bf16 %v567, %v563
    %v604 = vpack.c.bf16 %v568, %v564
    %v605 = vpack.c.bf16 %v573, %v569
    %v606 = vpack.c.bf16 %v574, %v570
    %v607 = vpack.c.bf16 %v575, %v571
    %v608 = vpack.c.bf16 %v576, %v572
    %v609 = vld [vmem:[#allocation4] sm:$0xff]
    %v610 = vld [vmem:[#allocation4 + $0x8] sm:$0xff]
    %v611 = vld [vmem:[#allocation4 + $0x10] sm:$0xff]
    %v612 = vld [vmem:[#allocation4 + $0x18] sm:$0xff]
    %v613 = vld [vmem:[#allocation4 + $0x20] sm:$0xff]
    %v614 = vld [vmem:[#allocation4 + $0x28] sm:$0xff]
    %v615 = vld [vmem:[#allocation4 + $0x30] sm:$0xff]
    %v616 = vld [vmem:[#allocation4 + $0x38] sm:$0xff]
    %v617 = vld [vmem:[#allocation4 + $0x40] sm:$0xff]
    %v618 = vld [vmem:[#allocation4 + $0x48] sm:$0xff]
    %v619 = vld [vmem:[#allocation4 + $0x50] sm:$0xff]
    %v620 = vld [vmem:[#allocation4 + $0x58] sm:$0xff]
    %v621 = vld [vmem:[#allocation4 + $0x60] sm:$0xff]
    %v622 = vld [vmem:[#allocation4 + $0x68] sm:$0xff]
    %v623 = vld [vmem:[#allocation4 + $0x70] sm:$0xff]
    %v624 = vld [vmem:[#allocation4 + $0x78] sm:$0xff]
    %v625 = vld [vmem:[#allocation4 + $0x80] sm:$0xff]
    %v626 = vld [vmem:[#allocation4 + $0x88] sm:$0xff]
    %v627 = vld [vmem:[#allocation4 + $0x90] sm:$0xff]
    %v628 = vld [vmem:[#allocation4 + $0x98] sm:$0xff]
    %v629 = vld [vmem:[#allocation4 + $0xa0] sm:$0xff]
    %v630 = vld [vmem:[#allocation4 + $0xa8] sm:$0xff]
    %v631 = vld [vmem:[#allocation4 + $0xb0] sm:$0xff]
    %v632 = vld [vmem:[#allocation4 + $0xb8] sm:$0xff]
    %v633 = vld [vmem:[#allocation4 + $0xc0] sm:$0xff]
    %v634 = vld [vmem:[#allocation4 + $0xc8] sm:$0xff]
    %v635 = vld [vmem:[#allocation4 + $0xd0] sm:$0xff]
    %v636 = vld [vmem:[#allocation4 + $0xd8] sm:$0xff]
    %v637 = vld [vmem:[#allocation4 + $0xe0] sm:$0xff]
    %v638 = vld [vmem:[#allocation4 + $0xe8] sm:$0xff]
    %v639 = vld [vmem:[#allocation4 + $0xf0] sm:$0xff]
    %v640 = vld [vmem:[#allocation4 + $0xf8] sm:$0xff]
    %v641 = vld [vmem:[#allocation4 + $0x100] sm:$0xff]
    %v642 = vld [vmem:[#allocation4 + $0x108] sm:$0xff]
    %v643 = vld [vmem:[#allocation4 + $0x110] sm:$0xff]
    %v644 = vld [vmem:[#allocation4 + $0x118] sm:$0xff]
    %v645 = vld [vmem:[#allocation4 + $0x120] sm:$0xff]
    %v646 = vld [vmem:[#allocation4 + $0x128] sm:$0xff]
    %v647 = vld [vmem:[#allocation4 + $0x130] sm:$0xff]
    %v648 = vld [vmem:[#allocation4 + $0x138] sm:$0xff]
    %v649 = vld [vmem:[#allocation4 + $0x140] sm:$0xff]
    %v650 = vld [vmem:[#allocation4 + $0x148] sm:$0xff]
    %v651 = vld [vmem:[#allocation4 + $0x150] sm:$0xff]
    %v652 = vld [vmem:[#allocation4 + $0x158] sm:$0xff]
    %v653 = vld [vmem:[#allocation4 + $0x160] sm:$0xff]
    %v654 = vld [vmem:[#allocation4 + $0x168] sm:$0xff]
    %v655 = vld [vmem:[#allocation4 + $0x170] sm:$0xff]
    %v656 = vld [vmem:[#allocation4 + $0x178] sm:$0xff]
    %v657 = vld [vmem:[#allocation4 + $0x180] sm:$0xff]
    %v658 = vld [vmem:[#allocation4 + $0x188] sm:$0xff]
    %v659 = vld [vmem:[#allocation4 + $0x190] sm:$0xff]
    %v660 = vld [vmem:[#allocation4 + $0x198] sm:$0xff]
    %v661 = vld [vmem:[#allocation4 + $0x1a0] sm:$0xff]
    %v662 = vld [vmem:[#allocation4 + $0x1a8] sm:$0xff]
    %v663 = vld [vmem:[#allocation4 + $0x1b0] sm:$0xff]
    %v664 = vld [vmem:[#allocation4 + $0x1b8] sm:$0xff]
    %v665 = vld [vmem:[#allocation4 + $0x1c0] sm:$0xff]
    %v666 = vld [vmem:[#allocation4 + $0x1c8] sm:$0xff]
    %v667 = vld [vmem:[#allocation4 + $0x1d0] sm:$0xff]
    %v668 = vld [vmem:[#allocation4 + $0x1d8] sm:$0xff]
    %v669 = vld [vmem:[#allocation4 + $0x1e0] sm:$0xff]
    %v670 = vld [vmem:[#allocation4 + $0x1e8] sm:$0xff]
    %v671 = vld [vmem:[#allocation4 + $0x1f0] sm:$0xff]
    %v672 = vld [vmem:[#allocation4 + $0x1f8] sm:$0xff]
    %v673 = vld [vmem:[#allocation4 + $0x200] sm:$0xff]
    %v674 = vld [vmem:[#allocation4 + $0x208] sm:$0xff]
    %v675 = vld [vmem:[#allocation4 + $0x210] sm:$0xff]
    %v676 = vld [vmem:[#allocation4 + $0x218] sm:$0xff]
    %v677 = vld [vmem:[#allocation4 + $0x220] sm:$0xff]
    %v678 = vld [vmem:[#allocation4 + $0x228] sm:$0xff]
    %v679 = vld [vmem:[#allocation4 + $0x230] sm:$0xff]
    %v680 = vld [vmem:[#allocation4 + $0x238] sm:$0xff]
    %v681 = vld [vmem:[#allocation4 + $0x240] sm:$0xff]
    %v682 = vld [vmem:[#allocation4 + $0x248] sm:$0xff]
    %v683 = vld [vmem:[#allocation4 + $0x250] sm:$0xff]
    %v684 = vld [vmem:[#allocation4 + $0x258] sm:$0xff]
    %v685 = vld [vmem:[#allocation4 + $0x260] sm:$0xff]
    %v686 = vld [vmem:[#allocation4 + $0x268] sm:$0xff]
    %v687 = vld [vmem:[#allocation4 + $0x270] sm:$0xff]
    %v688 = vld [vmem:[#allocation4 + $0x278] sm:$0xff]
    %v689 = vld [vmem:[#allocation4 + $0x280] sm:$0xff]
    %v690 = vld [vmem:[#allocation4 + $0x288] sm:$0xff]
    %v691 = vld [vmem:[#allocation4 + $0x290] sm:$0xff]
    %v692 = vld [vmem:[#allocation4 + $0x298] sm:$0xff]
    %v693 = vld [vmem:[#allocation4 + $0x2a0] sm:$0xff]
    %v694 = vld [vmem:[#allocation4 + $0x2a8] sm:$0xff]
    %v695 = vld [vmem:[#allocation4 + $0x2b0] sm:$0xff]
    %v696 = vld [vmem:[#allocation4 + $0x2b8] sm:$0xff]
    %v697 = vld [vmem:[#allocation4 + $0x2c0] sm:$0xff]
    %v698 = vld [vmem:[#allocation4 + $0x2c8] sm:$0xff]
    %v699 = vld [vmem:[#allocation4 + $0x2d0] sm:$0xff]
    %v700 = vld [vmem:[#allocation4 + $0x2d8] sm:$0xff]
    %v701 = vld [vmem:[#allocation4 + $0x2e0] sm:$0xff]
    %v702 = vld [vmem:[#allocation4 + $0x2e8] sm:$0xff]
    %v703 = vld [vmem:[#allocation4 + $0x2f0] sm:$0xff]
    %v704 = vld [vmem:[#allocation4 + $0x2f8] sm:$0xff]
    %v705 = vld [vmem:[#allocation4 + $0x300] sm:$0xff]
    %v706 = vld [vmem:[#allocation4 + $0x308] sm:$0xff]
    %v707 = vld [vmem:[#allocation4 + $0x310] sm:$0xff]
    %v708 = vld [vmem:[#allocation4 + $0x318] sm:$0xff]
    %v709 = vld [vmem:[#allocation4 + $0x320] sm:$0xff]
    %v710 = vld [vmem:[#allocation4 + $0x328] sm:$0xff]
    %v711 = vld [vmem:[#allocation4 + $0x330] sm:$0xff]
    %v712 = vld [vmem:[#allocation4 + $0x338] sm:$0xff]
    %v713 = vld [vmem:[#allocation4 + $0x340] sm:$0xff]
    %v714 = vld [vmem:[#allocation4 + $0x348] sm:$0xff]
    %v715 = vld [vmem:[#allocation4 + $0x350] sm:$0xff]
    %v716 = vld [vmem:[#allocation4 + $0x358] sm:$0xff]
    %v717 = vld [vmem:[#allocation4 + $0x360] sm:$0xff]
    %v718 = vld [vmem:[#allocation4 + $0x368] sm:$0xff]
    %v719 = vld [vmem:[#allocation4 + $0x370] sm:$0xff]
    %v720 = vld [vmem:[#allocation4 + $0x378] sm:$0xff]
    %v721 = vld [vmem:[#allocation4 + $0x380] sm:$0xff]
    %v722 = vld [vmem:[#allocation4 + $0x388] sm:$0xff]
    %v723 = vld [vmem:[#allocation4 + $0x390] sm:$0xff]
    %v724 = vld [vmem:[#allocation4 + $0x398] sm:$0xff]
    %v725 = vld [vmem:[#allocation4 + $0x3a0] sm:$0xff]
    %v726 = vld [vmem:[#allocation4 + $0x3a8] sm:$0xff]
    %v727 = vld [vmem:[#allocation4 + $0x3b0] sm:$0xff]
    %v728 = vld [vmem:[#allocation4 + $0x3b8] sm:$0xff]
    %v729 = vld [vmem:[#allocation4 + $0x3c0] sm:$0xff]
    %v730 = vld [vmem:[#allocation4 + $0x3c8] sm:$0xff]
    %v731 = vld [vmem:[#allocation4 + $0x3d0] sm:$0xff]
    %v732 = vld [vmem:[#allocation4 + $0x3d8] sm:$0xff]
    %v733 = vld [vmem:[#allocation4 + $0x3e0] sm:$0xff]
    %v734 = vld [vmem:[#allocation4 + $0x3e8] sm:$0xff]
    %v735 = vld [vmem:[#allocation4 + $0x3f0] sm:$0xff]
    %v736 = vld [vmem:[#allocation4 + $0x3f8] sm:$0xff]
    %v737 = vld [vmem:[%s4] sm:$0xf]
    %v739 = vlaneseq
    %v740 = vshrl.u32 %v739, 7
    %v741 = vsub.s32 0, %v740
    %v742 = vrot.slane %v737, %v741
    %v743 = vlaneseq
    %v744 = vshrl.u32 %v743, 7
    %v745 = vsub.s32 1, %v744
    %v746 = vrot.slane %v737, %v745
    %v747 = vlaneseq
    %v748 = vshrl.u32 %v747, 7
    %v749 = vsub.s32 2, %v748
    %v750 = vrot.slane %v737, %v749
    %v751 = vlaneseq
    %v752 = vshrl.u32 %v751, 7
    %v753 = vsub.s32 3, %v752
    %v754 = vrot.slane %v737, %v753
    %v887 = vunpack.c.l.b16 %v609
    %v888 = vunpack.c.h.b16 %v609
    %v889 = vunpack.c.l.b16 %v610
    %v890 = vunpack.c.h.b16 %v610
    %v891 = vunpack.c.l.b16 %v611
    %v892 = vunpack.c.h.b16 %v611
    %v893 = vunpack.c.l.b16 %v612
    %v894 = vunpack.c.h.b16 %v612
    %v895 = vunpack.c.l.b16 %v613
    %v896 = vunpack.c.h.b16 %v613
    %v897 = vunpack.c.l.b16 %v614
    %v898 = vunpack.c.h.b16 %v614
    %v899 = vunpack.c.l.b16 %v615
    %v900 = vunpack.c.h.b16 %v615
    %v901 = vunpack.c.l.b16 %v616
    %v902 = vunpack.c.h.b16 %v616
    %v903 = vunpack.c.l.b16 %v617
    %v904 = vunpack.c.h.b16 %v617
    %v905 = vunpack.c.l.b16 %v618
    %v906 = vunpack.c.h.b16 %v618
    %v907 = vunpack.c.l.b16 %v619
    %v908 = vunpack.c.h.b16 %v619
    %v909 = vunpack.c.l.b16 %v620
    %v910 = vunpack.c.h.b16 %v620
    %v911 = vunpack.c.l.b16 %v621
    %v912 = vunpack.c.h.b16 %v621
    %v913 = vunpack.c.l.b16 %v622
    %v914 = vunpack.c.h.b16 %v622
    %v915 = vunpack.c.l.b16 %v623
    %v916 = vunpack.c.h.b16 %v623
    %v917 = vunpack.c.l.b16 %v624
    %v918 = vunpack.c.h.b16 %v624
    %v919 = vunpack.c.l.b16 %v625
    %v920 = vunpack.c.h.b16 %v625
    %v921 = vunpack.c.l.b16 %v626
    %v922 = vunpack.c.h.b16 %v626
    %v923 = vunpack.c.l.b16 %v627
    %v924 = vunpack.c.h.b16 %v627
    %v925 = vunpack.c.l.b16 %v628
    %v926 = vunpack.c.h.b16 %v628
    %v927 = vunpack.c.l.b16 %v629
    %v928 = vunpack.c.h.b16 %v629
    %v929 = vunpack.c.l.b16 %v630
    %v930 = vunpack.c.h.b16 %v630
    %v931 = vunpack.c.l.b16 %v631
    %v932 = vunpack.c.h.b16 %v631
    %v933 = vunpack.c.l.b16 %v632
    %v934 = vunpack.c.h.b16 %v632
    %v935 = vunpack.c.l.b16 %v633
    %v936 = vunpack.c.h.b16 %v633
    %v937 = vunpack.c.l.b16 %v634
    %v938 = vunpack.c.h.b16 %v634
    %v939 = vunpack.c.l.b16 %v635
    %v940 = vunpack.c.h.b16 %v635
    %v941 = vunpack.c.l.b16 %v636
    %v942 = vunpack.c.h.b16 %v636
    %v943 = vunpack.c.l.b16 %v637
    %v944 = vunpack.c.h.b16 %v637
    %v945 = vunpack.c.l.b16 %v638
    %v946 = vunpack.c.h.b16 %v638
    %v947 = vunpack.c.l.b16 %v639
    %v948 = vunpack.c.h.b16 %v639
    %v949 = vunpack.c.l.b16 %v640
    %v950 = vunpack.c.h.b16 %v640
    %v951 = vunpack.c.l.b16 %v641
    %v952 = vunpack.c.h.b16 %v641
    %v953 = vunpack.c.l.b16 %v642
    %v954 = vunpack.c.h.b16 %v642
    %v955 = vunpack.c.l.b16 %v643
    %v956 = vunpack.c.h.b16 %v643
    %v957 = vunpack.c.l.b16 %v644
    %v958 = vunpack.c.h.b16 %v644
    %v959 = vunpack.c.l.b16 %v645
    %v960 = vunpack.c.h.b16 %v645
    %v961 = vunpack.c.l.b16 %v646
    %v962 = vunpack.c.h.b16 %v646
    %v963 = vunpack.c.l.b16 %v647
    %v964 = vunpack.c.h.b16 %v647
    %v965 = vunpack.c.l.b16 %v648
    %v966 = vunpack.c.h.b16 %v648
    %v967 = vunpack.c.l.b16 %v649
    %v968 = vunpack.c.h.b16 %v649
    %v969 = vunpack.c.l.b16 %v650
    %v970 = vunpack.c.h.b16 %v650
    %v971 = vunpack.c.l.b16 %v651
    %v972 = vunpack.c.h.b16 %v651
    %v973 = vunpack.c.l.b16 %v652
    %v974 = vunpack.c.h.b16 %v652
    %v975 = vunpack.c.l.b16 %v653
    %v976 = vunpack.c.h.b16 %v653
    %v977 = vunpack.c.l.b16 %v654
    %v978 = vunpack.c.h.b16 %v654
    %v979 = vunpack.c.l.b16 %v655
    %v980 = vunpack.c.h.b16 %v655
    %v981 = vunpack.c.l.b16 %v656
    %v982 = vunpack.c.h.b16 %v656
    %v983 = vunpack.c.l.b16 %v657
    %v984 = vunpack.c.h.b16 %v657
    %v985 = vunpack.c.l.b16 %v658
    %v986 = vunpack.c.h.b16 %v658
    %v987 = vunpack.c.l.b16 %v659
    %v988 = vunpack.c.h.b16 %v659
    %v989 = vunpack.c.l.b16 %v660
    %v990 = vunpack.c.h.b16 %v660
    %v991 = vunpack.c.l.b16 %v661
    %v992 = vunpack.c.h.b16 %v661
    %v993 = vunpack.c.l.b16 %v662
    %v994 = vunpack.c.h.b16 %v662
    %v995 = vunpack.c.l.b16 %v663
    %v996 = vunpack.c.h.b16 %v663
    %v997 = vunpack.c.l.b16 %v664
    %v998 = vunpack.c.h.b16 %v664
    %v999 = vunpack.c.l.b16 %v665
    %v1000 = vunpack.c.h.b16 %v665
    %v1001 = vunpack.c.l.b16 %v666
    %v1002 = vunpack.c.h.b16 %v666
    %v1003 = vunpack.c.l.b16 %v667
    %v1004 = vunpack.c.h.b16 %v667
    %v1005 = vunpack.c.l.b16 %v668
    %v1006 = vunpack.c.h.b16 %v668
    %v1007 = vunpack.c.l.b16 %v669
    %v1008 = vunpack.c.h.b16 %v669
    %v1009 = vunpack.c.l.b16 %v670
    %v1010 = vunpack.c.h.b16 %v670
    %v1011 = vunpack.c.l.b16 %v671
    %v1012 = vunpack.c.h.b16 %v671
    %v1013 = vunpack.c.l.b16 %v672
    %v1014 = vunpack.c.h.b16 %v672
    %v1015 = vunpack.c.l.b16 %v673
    %v1016 = vunpack.c.h.b16 %v673
    %v1017 = vunpack.c.l.b16 %v674
    %v1018 = vunpack.c.h.b16 %v674
    %v1019 = vunpack.c.l.b16 %v675
    %v1020 = vunpack.c.h.b16 %v675
    %v1021 = vunpack.c.l.b16 %v676
    %v1022 = vunpack.c.h.b16 %v676
    %v1023 = vunpack.c.l.b16 %v677
    %v1024 = vunpack.c.h.b16 %v677
    %v1025 = vunpack.c.l.b16 %v678
    %v1026 = vunpack.c.h.b16 %v678
    %v1027 = vunpack.c.l.b16 %v679
    %v1028 = vunpack.c.h.b16 %v679
    %v1029 = vunpack.c.l.b16 %v680
    %v1030 = vunpack.c.h.b16 %v680
    %v1031 = vunpack.c.l.b16 %v681
    %v1032 = vunpack.c.h.b16 %v681
    %v1033 = vunpack.c.l.b16 %v682
    %v1034 = vunpack.c.h.b16 %v682
    %v1035 = vunpack.c.l.b16 %v683
    %v1036 = vunpack.c.h.b16 %v683
    %v1037 = vunpack.c.l.b16 %v684
    %v1038 = vunpack.c.h.b16 %v684
    %v1039 = vunpack.c.l.b16 %v685
    %v1040 = vunpack.c.h.b16 %v685
    %v1041 = vunpack.c.l.b16 %v686
    %v1042 = vunpack.c.h.b16 %v686
    %v1043 = vunpack.c.l.b16 %v687
    %v1044 = vunpack.c.h.b16 %v687
    %v1045 = vunpack.c.l.b16 %v688
    %v1046 = vunpack.c.h.b16 %v688
    %v1047 = vunpack.c.l.b16 %v689
    %v1048 = vunpack.c.h.b16 %v689
    %v1049 = vunpack.c.l.b16 %v690
    %v1050 = vunpack.c.h.b16 %v690
    %v1051 = vunpack.c.l.b16 %v691
    %v1052 = vunpack.c.h.b16 %v691
    %v1053 = vunpack.c.l.b16 %v692
    %v1054 = vunpack.c.h.b16 %v692
    %v1055 = vunpack.c.l.b16 %v693
    %v1056 = vunpack.c.h.b16 %v693
    %v1057 = vunpack.c.l.b16 %v694
    %v1058 = vunpack.c.h.b16 %v694
    %v1059 = vunpack.c.l.b16 %v695
    %v1060 = vunpack.c.h.b16 %v695
    %v1061 = vunpack.c.l.b16 %v696
    %v1062 = vunpack.c.h.b16 %v696
    %v1063 = vunpack.c.l.b16 %v697
    %v1064 = vunpack.c.h.b16 %v697
    %v1065 = vunpack.c.l.b16 %v698
    %v1066 = vunpack.c.h.b16 %v698
    %v1067 = vunpack.c.l.b16 %v699
    %v1068 = vunpack.c.h.b16 %v699
    %v1069 = vunpack.c.l.b16 %v700
    %v1070 = vunpack.c.h.b16 %v700
    %v1071 = vunpack.c.l.b16 %v701
    %v1072 = vunpack.c.h.b16 %v701
    %v1073 = vunpack.c.l.b16 %v702
    %v1074 = vunpack.c.h.b16 %v702
    %v1075 = vunpack.c.l.b16 %v703
    %v1076 = vunpack.c.h.b16 %v703
    %v1077 = vunpack.c.l.b16 %v704
    %v1078 = vunpack.c.h.b16 %v704
    %v1079 = vunpack.c.l.b16 %v705
    %v1080 = vunpack.c.h.b16 %v705
    %v1081 = vunpack.c.l.b16 %v706
    %v1082 = vunpack.c.h.b16 %v706
    %v1083 = vunpack.c.l.b16 %v707
    %v1084 = vunpack.c.h.b16 %v707
    %v1085 = vunpack.c.l.b16 %v708
    %v1086 = vunpack.c.h.b16 %v708
    %v1087 = vunpack.c.l.b16 %v709
    %v1088 = vunpack.c.h.b16 %v709
    %v1089 = vunpack.c.l.b16 %v710
    %v1090 = vunpack.c.h.b16 %v710
    %v1091 = vunpack.c.l.b16 %v711
    %v1092 = vunpack.c.h.b16 %v711
    %v1093 = vunpack.c.l.b16 %v712
    %v1094 = vunpack.c.h.b16 %v712
    %v1095 = vunpack.c.l.b16 %v713
    %v1096 = vunpack.c.h.b16 %v713
    %v1097 = vunpack.c.l.b16 %v714
    %v1098 = vunpack.c.h.b16 %v714
    %v1099 = vunpack.c.l.b16 %v715
    %v1100 = vunpack.c.h.b16 %v715
    %v1101 = vunpack.c.l.b16 %v716
    %v1102 = vunpack.c.h.b16 %v716
    %v1103 = vunpack.c.l.b16 %v717
    %v1104 = vunpack.c.h.b16 %v717
    %v1105 = vunpack.c.l.b16 %v718
    %v1106 = vunpack.c.h.b16 %v718
    %v1107 = vunpack.c.l.b16 %v719
    %v1108 = vunpack.c.h.b16 %v719
    %v1109 = vunpack.c.l.b16 %v720
    %v1110 = vunpack.c.h.b16 %v720
    %v1111 = vunpack.c.l.b16 %v721
    %v1112 = vunpack.c.h.b16 %v721
    %v1113 = vunpack.c.l.b16 %v722
    %v1114 = vunpack.c.h.b16 %v722
    %v1115 = vunpack.c.l.b16 %v723
    %v1116 = vunpack.c.h.b16 %v723
    %v1117 = vunpack.c.l.b16 %v724
    %v1118 = vunpack.c.h.b16 %v724
    %v1119 = vunpack.c.l.b16 %v725
    %v1120 = vunpack.c.h.b16 %v725
    %v1121 = vunpack.c.l.b16 %v726
    %v1122 = vunpack.c.h.b16 %v726
    %v1123 = vunpack.c.l.b16 %v727
    %v1124 = vunpack.c.h.b16 %v727
    %v1125 = vunpack.c.l.b16 %v728
    %v1126 = vunpack.c.h.b16 %v728
    %v1127 = vunpack.c.l.b16 %v729
    %v1128 = vunpack.c.h.b16 %v729
    %v1129 = vunpack.c.l.b16 %v730
    %v1130 = vunpack.c.h.b16 %v730
    %v1131 = vunpack.c.l.b16 %v731
    %v1132 = vunpack.c.h.b16 %v731
    %v1133 = vunpack.c.l.b16 %v732
    %v1134 = vunpack.c.h.b16 %v732
    %v1135 = vunpack.c.l.b16 %v733
    %v1136 = vunpack.c.h.b16 %v733
    %v1137 = vunpack.c.l.b16 %v734
    %v1138 = vunpack.c.h.b16 %v734
    %v1139 = vunpack.c.l.b16 %v735
    %v1140 = vunpack.c.h.b16 %v735
    %v1141 = vunpack.c.l.b16 %v736
    %v1142 = vunpack.c.h.b16 %v736
    %v1143 = vpack.c.b16 %v891, %v887
    %v1144 = vpack.c.b16 %v892, %v888
    %v1145 = vpack.c.b16 %v893, %v889
    %v1146 = vpack.c.b16 %v894, %v890
    %v1147 = vpack.c.b16 %v899, %v895
    %v1148 = vpack.c.b16 %v900, %v896
    %v1149 = vpack.c.b16 %v901, %v897
    %v1150 = vpack.c.b16 %v902, %v898
    %v1151 = vpack.c.b16 %v907, %v903
    %v1152 = vpack.c.b16 %v908, %v904
    %v1153 = vpack.c.b16 %v909, %v905
    %v1154 = vpack.c.b16 %v910, %v906
    %v1155 = vpack.c.b16 %v915, %v911
    %v1156 = vpack.c.b16 %v916, %v912
    %v1157 = vpack.c.b16 %v917, %v913
    %v1158 = vpack.c.b16 %v918, %v914
    %v1159 = vpack.c.b16 %v923, %v919
    %v1160 = vpack.c.b16 %v924, %v920
    %v1161 = vpack.c.b16 %v925, %v921
    %v1162 = vpack.c.b16 %v926, %v922
    %v1163 = vpack.c.b16 %v931, %v927
    %v1164 = vpack.c.b16 %v932, %v928
    %v1165 = vpack.c.b16 %v933, %v929
    %v1166 = vpack.c.b16 %v934, %v930
    %v1167 = vpack.c.b16 %v939, %v935
    %v1168 = vpack.c.b16 %v940, %v936
    %v1169 = vpack.c.b16 %v941, %v937
    %v1170 = vpack.c.b16 %v942, %v938
    %v1171 = vpack.c.b16 %v947, %v943
    %v1172 = vpack.c.b16 %v948, %v944
    %v1173 = vpack.c.b16 %v949, %v945
    %v1174 = vpack.c.b16 %v950, %v946
    %v1175 = vpack.c.b16 %v955, %v951
    %v1176 = vpack.c.b16 %v956, %v952
    %v1177 = vpack.c.b16 %v957, %v953
    %v1178 = vpack.c.b16 %v958, %v954
    %v1179 = vpack.c.b16 %v963, %v959
    %v1180 = vpack.c.b16 %v964, %v960
    %v1181 = vpack.c.b16 %v965, %v961
    %v1182 = vpack.c.b16 %v966, %v962
    %v1183 = vpack.c.b16 %v971, %v967
    %v1184 = vpack.c.b16 %v972, %v968
    %v1185 = vpack.c.b16 %v973, %v969
    %v1186 = vpack.c.b16 %v974, %v970
    %v1187 = vpack.c.b16 %v979, %v975
    %v1188 = vpack.c.b16 %v980, %v976
    %v1189 = vpack.c.b16 %v981, %v977
    %v1190 = vpack.c.b16 %v982, %v978
    %v1191 = vpack.c.b16 %v987, %v983
    %v1192 = vpack.c.b16 %v988, %v984
    %v1193 = vpack.c.b16 %v989, %v985
    %v1194 = vpack.c.b16 %v990, %v986
    %v1195 = vpack.c.b16 %v995, %v991
    %v1196 = vpack.c.b16 %v996, %v992
    %v1197 = vpack.c.b16 %v997, %v993
    %v1198 = vpack.c.b16 %v998, %v994
    %v1199 = vpack.c.b16 %v1003, %v999
    %v1200 = vpack.c.b16 %v1004, %v1000
    %v1201 = vpack.c.b16 %v1005, %v1001
    %v1202 = vpack.c.b16 %v1006, %v1002
    %v1203 = vpack.c.b16 %v1011, %v1007
    %v1204 = vpack.c.b16 %v1012, %v1008
    %v1205 = vpack.c.b16 %v1013, %v1009
    %v1206 = vpack.c.b16 %v1014, %v1010
    %v1207 = vpack.c.b16 %v1019, %v1015
    %v1208 = vpack.c.b16 %v1020, %v1016
    %v1209 = vpack.c.b16 %v1021, %v1017
    %v1210 = vpack.c.b16 %v1022, %v1018
    %v1211 = vpack.c.b16 %v1027, %v1023
    %v1212 = vpack.c.b16 %v1028, %v1024
    %v1213 = vpack.c.b16 %v1029, %v1025
    %v1214 = vpack.c.b16 %v1030, %v1026
    %v1215 = vpack.c.b16 %v1035, %v1031
    %v1216 = vpack.c.b16 %v1036, %v1032
    %v1217 = vpack.c.b16 %v1037, %v1033
    %v1218 = vpack.c.b16 %v1038, %v1034
    %v1219 = vpack.c.b16 %v1043, %v1039
    %v1220 = vpack.c.b16 %v1044, %v1040
    %v1221 = vpack.c.b16 %v1045, %v1041
    %v1222 = vpack.c.b16 %v1046, %v1042
    %v1223 = vpack.c.b16 %v1051, %v1047
    %v1224 = vpack.c.b16 %v1052, %v1048
    %v1225 = vpack.c.b16 %v1053, %v1049
    %v1226 = vpack.c.b16 %v1054, %v1050
    %v1227 = vpack.c.b16 %v1059, %v1055
    %v1228 = vpack.c.b16 %v1060, %v1056
    %v1229 = vpack.c.b16 %v1061, %v1057
    %v1230 = vpack.c.b16 %v1062, %v1058
    %v1231 = vpack.c.b16 %v1067, %v1063
    %v1232 = vpack.c.b16 %v1068, %v1064
    %v1233 = vpack.c.b16 %v1069, %v1065
    %v1234 = vpack.c.b16 %v1070, %v1066
    %v1235 = vpack.c.b16 %v1075, %v1071
    %v1236 = vpack.c.b16 %v1076, %v1072
    %v1237 = vpack.c.b16 %v1077, %v1073
    %v1238 = vpack.c.b16 %v1078, %v1074
    %v1239 = vpack.c.b16 %v1083, %v1079
    %v1240 = vpack.c.b16 %v1084, %v1080
    %v1241 = vpack.c.b16 %v1085, %v1081
    %v1242 = vpack.c.b16 %v1086, %v1082
    %v1243 = vpack.c.b16 %v1091, %v1087
    %v1244 = vpack.c.b16 %v1092, %v1088
    %v1245 = vpack.c.b16 %v1093, %v1089
    %v1246 = vpack.c.b16 %v1094, %v1090
    %v1247 = vpack.c.b16 %v1099, %v1095
    %v1248 = vpack.c.b16 %v1100, %v1096
    %v1249 = vpack.c.b16 %v1101, %v1097
    %v1250 = vpack.c.b16 %v1102, %v1098
    %v1251 = vpack.c.b16 %v1107, %v1103
    %v1252 = vpack.c.b16 %v1108, %v1104
    %v1253 = vpack.c.b16 %v1109, %v1105
    %v1254 = vpack.c.b16 %v1110, %v1106
    %v1255 = vpack.c.b16 %v1115, %v1111
    %v1256 = vpack.c.b16 %v1116, %v1112
    %v1257 = vpack.c.b16 %v1117, %v1113
    %v1258 = vpack.c.b16 %v1118, %v1114
    %v1259 = vpack.c.b16 %v1123, %v1119
    %v1260 = vpack.c.b16 %v1124, %v1120
    %v1261 = vpack.c.b16 %v1125, %v1121
    %v1262 = vpack.c.b16 %v1126, %v1122
    %v1263 = vpack.c.b16 %v1131, %v1127
    %v1264 = vpack.c.b16 %v1132, %v1128
    %v1265 = vpack.c.b16 %v1133, %v1129
    %v1266 = vpack.c.b16 %v1134, %v1130
    %v1267 = vpack.c.b16 %v1139, %v1135
    %v1268 = vpack.c.b16 %v1140, %v1136
    %v1269 = vpack.c.b16 %v1141, %v1137
    %v1270 = vpack.c.b16 %v1142, %v1138
    %1399 = vmatprep.subr.bf16.mxu0 %v1144
    %1400 = vmatpush1.bf16.msra.mxu0 %v1143
    %1401 = vmatprep.subr.bf16.mxu0 %v1148
    %1402 = vmatpush1.bf16.msra.mxu0 %v1147
    %1403 = vmatprep.subr.bf16.mxu0 %v1152
    %1404 = vmatpush1.bf16.msra.mxu0 %v1151
    %1405 = vmatprep.subr.bf16.mxu0 %v1156
    %1406 = vmatpush1.bf16.msra.mxu0 %v1155
    %1407 = vmatprep.subr.bf16.mxu0 %v1160
    %1408 = vmatpush1.bf16.msra.mxu0 %v1159
    %1409 = vmatprep.subr.bf16.mxu0 %v1164
    %1410 = vmatpush1.bf16.msra.mxu0 %v1163
    %1411 = vmatprep.subr.bf16.mxu0 %v1168
    %1412 = vmatpush1.bf16.msra.mxu0 %v1167
    %1413 = vmatprep.subr.bf16.mxu0 %v1172
    %1414 = vmatpush1.bf16.msra.mxu0 %v1171
    %1415 = vmatprep.subr.bf16.mxu0 %v1176
    %1416 = vmatpush1.bf16.msra.mxu0 %v1175
    %1417 = vmatprep.subr.bf16.mxu0 %v1180
    %1418 = vmatpush1.bf16.msra.mxu0 %v1179
    %1419 = vmatprep.subr.bf16.mxu0 %v1184
    %1420 = vmatpush1.bf16.msra.mxu0 %v1183
    %1421 = vmatprep.subr.bf16.mxu0 %v1188
    %1422 = vmatpush1.bf16.msra.mxu0 %v1187
    %1423 = vmatprep.subr.bf16.mxu0 %v1192
    %1424 = vmatpush1.bf16.msra.mxu0 %v1191
    %1425 = vmatprep.subr.bf16.mxu0 %v1196
    %1426 = vmatpush1.bf16.msra.mxu0 %v1195
    %1427 = vmatprep.subr.bf16.mxu0 %v1200
    %1428 = vmatpush1.bf16.msra.mxu0 %v1199
    %1429 = vmatprep.subr.bf16.mxu0 %v1204
    %1430 = vmatpush1.bf16.msra.mxu0 %v1203
    %1431 = vmatprep.mubr.bf16.mxu0 %v578
    %1432 = vmatmul.mubr.bf16.gmra.mrb[0].mxu0 %v577
    %v1433 = vpop.f32.mrb[0].mxu0
    %v1434 = vadd.f32 %v742, %v1433
    %v1435 = vpop.f32.mrb[0].mxu0
    %v1436 = vadd.f32 %v746, %v1435
    %v1437 = vpop.f32.mrb[0].mxu0
    %v1438 = vadd.f32 %v742, %v1437
    %v1439 = vpop.f32.mrb[0].mxu0
    %v1440 = vadd.f32 %v746, %v1439
    %1441 = vmatprep.mubr.bf16.mxu0 %v582
    %1442 = vmatmul.mubr.bf16.gmra.mrb[0].mxu0 %v581
    %v1443 = vpop.f32.mrb[0].mxu0
    %v1444 = vadd.f32 %v742, %v1443
    %v1445 = vpop.f32.mrb[0].mxu0
    %v1446 = vadd.f32 %v746, %v1445
    %v1447 = vpop.f32.mrb[0].mxu0
    %v1448 = vadd.f32 %v742, %v1447
    %v1449 = vpop.f32.mrb[0].mxu0
    %v1450 = vadd.f32 %v746, %v1449
    %1451 = vmatprep.mubr.bf16.mxu0 %v586
    %1452 = vmatmul.mubr.bf16.gmra.mrb[0].mxu0 %v585
    %v1453 = vpop.f32.mrb[0].mxu0
    %v1454 = vadd.f32 %v742, %v1453
    %v1455 = vpop.f32.mrb[0].mxu0
    %v1456 = vadd.f32 %v746, %v1455
    %v1457 = vpop.f32.mrb[0].mxu0
    %v1458 = vadd.f32 %v742, %v1457
    %v1459 = vpop.f32.mrb[0].mxu0
    %v1460 = vadd.f32 %v746, %v1459
    %1461 = vmatprep.mubr.bf16.mxu0 %v590
    %1462 = vmatmul.mubr.bf16.gmra.mrb[0].mxu0 %v589
    %v1463 = vpop.f32.mrb[0].mxu0
    %v1464 = vadd.f32 %v742, %v1463
    %v1465 = vpop.f32.mrb[0].mxu0
    %v1466 = vadd.f32 %v746, %v1465
    %v1467 = vpop.f32.mrb[0].mxu0
    %v1468 = vadd.f32 %v742, %v1467
    %v1469 = vpop.f32.mrb[0].mxu0
    %v1470 = vadd.f32 %v746, %v1469
    %1471 = vmatprep.mubr.bf16.mxu0 %v594
    %1472 = vmatmul.mubr.bf16.gmra.mrb[0].mxu0 %v593
    %v1473 = vpop.f32.mrb[0].mxu0
    %v1474 = vadd.f32 %v742, %v1473
    %v1475 = vpop.f32.mrb[0].mxu0
    %v1476 = vadd.f32 %v746, %v1475
    %v1477 = vpop.f32.mrb[0].mxu0
    %v1478 = vadd.f32 %v742, %v1477
    %v1479 = vpop.f32.mrb[0].mxu0
    %v1480 = vadd.f32 %v746, %v1479
    %1481 = vmatprep.mubr.bf16.mxu0 %v598
    %1482 = vmatmul.mubr.bf16.gmra.mrb[0].mxu0 %v597
    %v1483 = vpop.f32.mrb[0].mxu0
    %v1484 = vadd.f32 %v742, %v1483
    %v1485 = vpop.f32.mrb[0].mxu0
    %v1486 = vadd.f32 %v746, %v1485
    %v1487 = vpop.f32.mrb[0].mxu0
    %v1488 = vadd.f32 %v742, %v1487
    %v1489 = vpop.f32.mrb[0].mxu0
    %v1490 = vadd.f32 %v746, %v1489
    %1491 = vmatprep.mubr.bf16.mxu0 %v602
    %1492 = vmatmul.mubr.bf16.gmra.mrb[0].mxu0 %v601
    %v1493 = vpop.f32.mrb[0].mxu0
    %v1494 = vadd.f32 %v742, %v1493
    %v1495 = vpop.f32.mrb[0].mxu0
    %v1496 = vadd.f32 %v746, %v1495
    %v1497 = vpop.f32.mrb[0].mxu0
    %v1498 = vadd.f32 %v742, %v1497
    %v1499 = vpop.f32.mrb[0].mxu0
    %v1500 = vadd.f32 %v746, %v1499
    %1501 = vmatprep.mubr.bf16.mxu0 %v606
    %1502 = vmatmul.mubr.bf16.gmra.mrb[0].mxu0 %v605
    %v1503 = vpop.f32.mrb[0].mxu0
    %v1504 = vadd.f32 %v742, %v1503
    %v1505 = vpop.f32.mrb[0].mxu0
    %v1506 = vadd.f32 %v746, %v1505
    %v1507 = vpop.f32.mrb[0].mxu0
    %v1508 = vadd.f32 %v742, %v1507
    %v1509 = vpop.f32.mrb[0].mxu0
    %v1510 = vadd.f32 %v746, %v1509
    %1511 = vdwg.mxu0
    %1512 = vmatprep.subr.bf16.mxu0 %v1208
    %1513 = vmatpush1.bf16.msra.mxu0 %v1207
    %1514 = vmatprep.subr.bf16.mxu0 %v1212
    %1515 = vmatpush1.bf16.msra.mxu0 %v1211
    %1516 = vmatprep.subr.bf16.mxu0 %v1216
    %1517 = vmatpush1.bf16.msra.mxu0 %v1215
    %1518 = vmatprep.subr.bf16.mxu0 %v1220
    %1519 = vmatpush1.bf16.msra.mxu0 %v1219
    %1520 = vmatprep.subr.bf16.mxu0 %v1224
    %1521 = vmatpush1.bf16.msra.mxu0 %v1223
    %1522 = vmatprep.subr.bf16.mxu0 %v1228
    %1523 = vmatpush1.bf16.msra.mxu0 %v1227
    %1524 = vmatprep.subr.bf16.mxu0 %v1232
    %1525 = vmatpush1.bf16.msra.mxu0 %v1231
    %1526 = vmatprep.subr.bf16.mxu0 %v1236
    %1527 = vmatpush1.bf16.msra.mxu0 %v1235
    %1528 = vmatprep.subr.bf16.mxu0 %v1240
    %1529 = vmatpush1.bf16.msra.mxu0 %v1239
    %1530 = vmatprep.subr.bf16.mxu0 %v1244
    %1531 = vmatpush1.bf16.msra.mxu0 %v1243
    %1532 = vmatprep.subr.bf16.mxu0 %v1248
    %1533 = vmatpush1.bf16.msra.mxu0 %v1247
    %1534 = vmatprep.subr.bf16.mxu0 %v1252
    %1535 = vmatpush1.bf16.msra.mxu0 %v1251
    %1536 = vmatprep.subr.bf16.mxu0 %v1256
    %1537 = vmatpush1.bf16.msra.mxu0 %v1255
    %1538 = vmatprep.subr.bf16.mxu0 %v1260
    %1539 = vmatpush1.bf16.msra.mxu0 %v1259
    %1540 = vmatprep.subr.bf16.mxu0 %v1264
    %1541 = vmatpush1.bf16.msra.mxu0 %v1263
    %1542 = vmatprep.subr.bf16.mxu0 %v1268
    %1543 = vmatpush1.bf16.msra.mxu0 %v1267
    %1544 = vmatprep.mubr.bf16.mxu0 %v580
    %1545 = vmatmul.mubr.bf16.gmra.mrb[0].mxu0 %v579
    %v1546 = vpop.f32.mrb[0].mxu0
    %v1547 = vadd.f32 %v1434, %v1546
    %v1548 = vpop.f32.mrb[0].mxu0
    %v1549 = vadd.f32 %v1436, %v1548
    %v1550 = vpop.f32.mrb[0].mxu0
    %v1551 = vadd.f32 %v1438, %v1550
    %v1552 = vpop.f32.mrb[0].mxu0
    %v1553 = vadd.f32 %v1440, %v1552
    %1554 = vmatprep.mubr.bf16.mxu0 %v584
    %1555 = vmatmul.mubr.bf16.gmra.mrb[0].mxu0 %v583
    %v1556 = vpop.f32.mrb[0].mxu0
    %v1557 = vadd.f32 %v1444, %v1556
    %v1558 = vpop.f32.mrb[0].mxu0
    %v1559 = vadd.f32 %v1446, %v1558
    %v1560 = vpop.f32.mrb[0].mxu0
    %v1561 = vadd.f32 %v1448, %v1560
    %v1562 = vpop.f32.mrb[0].mxu0
    %v1563 = vadd.f32 %v1450, %v1562
    %1564 = vmatprep.mubr.bf16.mxu0 %v588
    %1565 = vmatmul.mubr.bf16.gmra.mrb[0].mxu0 %v587
    %v1566 = vpop.f32.mrb[0].mxu0
    %v1567 = vadd.f32 %v1454, %v1566
    %v1568 = vpop.f32.mrb[0].mxu0
    %v1569 = vadd.f32 %v1456, %v1568
    %v1570 = vpop.f32.mrb[0].mxu0
    %v1571 = vadd.f32 %v1458, %v1570
    %v1572 = vpop.f32.mrb[0].mxu0
    %v1573 = vadd.f32 %v1460, %v1572
    %1574 = vmatprep.mubr.bf16.mxu0 %v592
    %1575 = vmatmul.mubr.bf16.gmra.mrb[0].mxu0 %v591
    %v1576 = vpop.f32.mrb[0].mxu0
    %v1577 = vadd.f32 %v1464, %v1576
    %v1578 = vpop.f32.mrb[0].mxu0
    %v1579 = vadd.f32 %v1466, %v1578
    %v1580 = vpop.f32.mrb[0].mxu0
    %v1581 = vadd.f32 %v1468, %v1580
    %v1582 = vpop.f32.mrb[0].mxu0
    %v1583 = vadd.f32 %v1470, %v1582
    %1584 = vmatprep.mubr.bf16.mxu0 %v596
    %1585 = vmatmul.mubr.bf16.gmra.mrb[0].mxu0 %v595
    %v1586 = vpop.f32.mrb[0].mxu0
    %v1587 = vadd.f32 %v1474, %v1586
    %v1588 = vpop.f32.mrb[0].mxu0
    %v1589 = vadd.f32 %v1476, %v1588
    %v1590 = vpop.f32.mrb[0].mxu0
    %v1591 = vadd.f32 %v1478, %v1590
    %v1592 = vpop.f32.mrb[0].mxu0
    %v1593 = vadd.f32 %v1480, %v1592
    %1594 = vmatprep.mubr.bf16.mxu0 %v600
    %1595 = vmatmul.mubr.bf16.gmra.mrb[0].mxu0 %v599
    %v1596 = vpop.f32.mrb[0].mxu0
    %v1597 = vadd.f32 %v1484, %v1596
    %v1598 = vpop.f32.mrb[0].mxu0
    %v1599 = vadd.f32 %v1486, %v1598
    %v1600 = vpop.f32.mrb[0].mxu0
    %v1601 = vadd.f32 %v1488, %v1600
    %v1602 = vpop.f32.mrb[0].mxu0
    %v1603 = vadd.f32 %v1490, %v1602
    %1604 = vmatprep.mubr.bf16.mxu0 %v604
    %1605 = vmatmul.mubr.bf16.gmra.mrb[0].mxu0 %v603
    %v1606 = vpop.f32.mrb[0].mxu0
    %v1607 = vadd.f32 %v1494, %v1606
    %v1608 = vpop.f32.mrb[0].mxu0
    %v1609 = vadd.f32 %v1496, %v1608
    %v1610 = vpop.f32.mrb[0].mxu0
    %v1611 = vadd.f32 %v1498, %v1610
    %v1612 = vpop.f32.mrb[0].mxu0
    %v1613 = vadd.f32 %v1500, %v1612
    %1614 = vmatprep.mubr.bf16.mxu0 %v608
    %1615 = vmatmul.mubr.bf16.gmra.mrb[0].mxu0 %v607
    %v1616 = vpop.f32.mrb[0].mxu0
    %v1617 = vadd.f32 %v1504, %v1616
    %v1618 = vpop.f32.mrb[0].mxu0
    %v1619 = vadd.f32 %v1506, %v1618
    %v1620 = vpop.f32.mrb[0].mxu0
    %v1621 = vadd.f32 %v1508, %v1620
    %v1622 = vpop.f32.mrb[0].mxu0
    %v1623 = vadd.f32 %v1510, %v1622
    %1624 = vdwg.mxu0
    %1625 = vmatprep.subr.bf16.mxu0 %v1146
    %1626 = vmatpush1.bf16.msra.mxu0 %v1145
    %1627 = vmatprep.subr.bf16.mxu0 %v1150
    %1628 = vmatpush1.bf16.msra.mxu0 %v1149
    %1629 = vmatprep.subr.bf16.mxu0 %v1154
    %1630 = vmatpush1.bf16.msra.mxu0 %v1153
    %1631 = vmatprep.subr.bf16.mxu0 %v1158
    %1632 = vmatpush1.bf16.msra.mxu0 %v1157
    %1633 = vmatprep.subr.bf16.mxu0 %v1162
    %1634 = vmatpush1.bf16.msra.mxu0 %v1161
    %1635 = vmatprep.subr.bf16.mxu0 %v1166
    %1636 = vmatpush1.bf16.msra.mxu0 %v1165
    %1637 = vmatprep.subr.bf16.mxu0 %v1170
    %1638 = vmatpush1.bf16.msra.mxu0 %v1169
    %1639 = vmatprep.subr.bf16.mxu0 %v1174
    %1640 = vmatpush1.bf16.msra.mxu0 %v1173
    %1641 = vmatprep.subr.bf16.mxu0 %v1178
    %1642 = vmatpush1.bf16.msra.mxu0 %v1177
    %1643 = vmatprep.subr.bf16.mxu0 %v1182
    %1644 = vmatpush1.bf16.msra.mxu0 %v1181
    %1645 = vmatprep.subr.bf16.mxu0 %v1186
    %1646 = vmatpush1.bf16.msra.mxu0 %v1185
    %1647 = vmatprep.subr.bf16.mxu0 %v1190
    %1648 = vmatpush1.bf16.msra.mxu0 %v1189
    %1649 = vmatprep.subr.bf16.mxu0 %v1194
    %1650 = vmatpush1.bf16.msra.mxu0 %v1193
    %1651 = vmatprep.subr.bf16.mxu0 %v1198
    %1652 = vmatpush1.bf16.msra.mxu0 %v1197
    %1653 = vmatprep.subr.bf16.mxu0 %v1202
    %1654 = vmatpush1.bf16.msra.mxu0 %v1201
    %1655 = vmatprep.subr.bf16.mxu0 %v1206
    %1656 = vmatpush1.bf16.msra.mxu0 %v1205
    %1657 = vmatprep.mubr.bf16.mxu0 %v578
    %1658 = vmatmul.mubr.bf16.gmra.mrb[0].mxu0 %v577
    %v1659 = vpop.f32.mrb[0].mxu0
    %v1660 = vadd.f32 %v750, %v1659
    %v1661 = vpop.f32.mrb[0].mxu0
    %v1662 = vadd.f32 %v754, %v1661
    %v1663 = vpop.f32.mrb[0].mxu0
    %v1664 = vadd.f32 %v750, %v1663
    %v1665 = vpop.f32.mrb[0].mxu0
    %v1666 = vadd.f32 %v754, %v1665
    %1667 = vmatprep.mubr.bf16.mxu0 %v582
    %1668 = vmatmul.mubr.bf16.gmra.mrb[0].mxu0 %v581
    %v1669 = vpop.f32.mrb[0].mxu0
    %v1670 = vadd.f32 %v750, %v1669
    %v1671 = vpop.f32.mrb[0].mxu0
    %v1672 = vadd.f32 %v754, %v1671
    %v1673 = vpop.f32.mrb[0].mxu0
    %v1674 = vadd.f32 %v750, %v1673
    %v1675 = vpop.f32.mrb[0].mxu0
    %v1676 = vadd.f32 %v754, %v1675
    %1677 = vmatprep.mubr.bf16.mxu0 %v586
    %1678 = vmatmul.mubr.bf16.gmra.mrb[0].mxu0 %v585
    %v1679 = vpop.f32.mrb[0].mxu0
    %v1680 = vadd.f32 %v750, %v1679
    %v1681 = vpop.f32.mrb[0].mxu0
    %v1682 = vadd.f32 %v754, %v1681
    %v1683 = vpop.f32.mrb[0].mxu0
    %v1684 = vadd.f32 %v750, %v1683
    %v1685 = vpop.f32.mrb[0].mxu0
    %v1686 = vadd.f32 %v754, %v1685
    %1687 = vmatprep.mubr.bf16.mxu0 %v590
    %1688 = vmatmul.mubr.bf16.gmra.mrb[0].mxu0 %v589
    %v1689 = vpop.f32.mrb[0].mxu0
    %v1690 = vadd.f32 %v750, %v1689
    %v1691 = vpop.f32.mrb[0].mxu0
    %v1692 = vadd.f32 %v754, %v1691
    %v1693 = vpop.f32.mrb[0].mxu0
    %v1694 = vadd.f32 %v750, %v1693
    %v1695 = vpop.f32.mrb[0].mxu0
    %v1696 = vadd.f32 %v754, %v1695
    %1697 = vmatprep.mubr.bf16.mxu0 %v594
    %1698 = vmatmul.mubr.bf16.gmra.mrb[0].mxu0 %v593
    %v1699 = vpop.f32.mrb[0].mxu0
    %v1700 = vadd.f32 %v750, %v1699
    %v1701 = vpop.f32.mrb[0].mxu0
    %v1702 = vadd.f32 %v754, %v1701
    %v1703 = vpop.f32.mrb[0].mxu0
    %v1704 = vadd.f32 %v750, %v1703
    %v1705 = vpop.f32.mrb[0].mxu0
    %v1706 = vadd.f32 %v754, %v1705
    %1707 = vmatprep.mubr.bf16.mxu0 %v598
    %1708 = vmatmul.mubr.bf16.gmra.mrb[0].mxu0 %v597
    %v1709 = vpop.f32.mrb[0].mxu0
    %v1710 = vadd.f32 %v750, %v1709
    %v1711 = vpop.f32.mrb[0].mxu0
    %v1712 = vadd.f32 %v754, %v1711
    %v1713 = vpop.f32.mrb[0].mxu0
    %v1714 = vadd.f32 %v750, %v1713
    %v1715 = vpop.f32.mrb[0].mxu0
    %v1716 = vadd.f32 %v754, %v1715
    %1717 = vmatprep.mubr.bf16.mxu0 %v602
    %1718 = vmatmul.mubr.bf16.gmra.mrb[0].mxu0 %v601
    %v1719 = vpop.f32.mrb[0].mxu0
    %v1720 = vadd.f32 %v750, %v1719
    %v1721 = vpop.f32.mrb[0].mxu0
    %v1722 = vadd.f32 %v754, %v1721
    %v1723 = vpop.f32.mrb[0].mxu0
    %v1724 = vadd.f32 %v750, %v1723
    %v1725 = vpop.f32.mrb[0].mxu0
    %v1726 = vadd.f32 %v754, %v1725
    %1727 = vmatprep.mubr.bf16.mxu0 %v606
    %1728 = vmatmul.mubr.bf16.gmra.mrb[0].mxu0 %v605
    %v1729 = vpop.f32.mrb[0].mxu0
    %v1730 = vadd.f32 %v750, %v1729
    %v1731 = vpop.f32.mrb[0].mxu0
    %v1732 = vadd.f32 %v754, %v1731
    %v1733 = vpop.f32.mrb[0].mxu0
    %v1734 = vadd.f32 %v750, %v1733
    %v1735 = vpop.f32.mrb[0].mxu0
    %v1736 = vadd.f32 %v754, %v1735
    %1737 = vdwg.mxu0
    %1738 = vmatprep.subr.bf16.mxu0 %v1210
    %1739 = vmatpush1.bf16.msra.mxu0 %v1209
    %1740 = vmatprep.subr.bf16.mxu0 %v1214
    %1741 = vmatpush1.bf16.msra.mxu0 %v1213
    %1742 = vmatprep.subr.bf16.mxu0 %v1218
    %1743 = vmatpush1.bf16.msra.mxu0 %v1217
    %1744 = vmatprep.subr.bf16.mxu0 %v1222
    %1745 = vmatpush1.bf16.msra.mxu0 %v1221
    %1746 = vmatprep.subr.bf16.mxu0 %v1226
    %1747 = vmatpush1.bf16.msra.mxu0 %v1225
    %1748 = vmatprep.subr.bf16.mxu0 %v1230
    %1749 = vmatpush1.bf16.msra.mxu0 %v1229
    %1750 = vmatprep.subr.bf16.mxu0 %v1234
    %1751 = vmatpush1.bf16.msra.mxu0 %v1233
    %1752 = vmatprep.subr.bf16.mxu0 %v1238
    %1753 = vmatpush1.bf16.msra.mxu0 %v1237
    %1754 = vmatprep.subr.bf16.mxu0 %v1242
    %1755 = vmatpush1.bf16.msra.mxu0 %v1241
    %1756 = vmatprep.subr.bf16.mxu0 %v1246
    %1757 = vmatpush1.bf16.msra.mxu0 %v1245
    %1758 = vmatprep.subr.bf16.mxu0 %v1250
    %1759 = vmatpush1.bf16.msra.mxu0 %v1249
    %1760 = vmatprep.subr.bf16.mxu0 %v1254
    %1761 = vmatpush1.bf16.msra.mxu0 %v1253
    %1762 = vmatprep.subr.bf16.mxu0 %v1258
    %1763 = vmatpush1.bf16.msra.mxu0 %v1257
    %1764 = vmatprep.subr.bf16.mxu0 %v1262
    %1765 = vmatpush1.bf16.msra.mxu0 %v1261
    %1766 = vmatprep.subr.bf16.mxu0 %v1266
    %1767 = vmatpush1.bf16.msra.mxu0 %v1265
    %1768 = vmatprep.subr.bf16.mxu0 %v1270
    %1769 = vmatpush1.bf16.msra.mxu0 %v1269
    %1770 = vmatprep.mubr.bf16.mxu0 %v580
    %1771 = vmatmul.mubr.bf16.gmra.mrb[0].mxu0 %v579
    %v1772 = vpop.f32.mrb[0].mxu0
    %v1773 = vadd.f32 %v1660, %v1772
    %v1774 = vpop.f32.mrb[0].mxu0
    %v1775 = vadd.f32 %v1662, %v1774
    %v1776 = vpop.f32.mrb[0].mxu0
    %v1777 = vadd.f32 %v1664, %v1776
    %v1778 = vpop.f32.mrb[0].mxu0
    %v1779 = vadd.f32 %v1666, %v1778
    %1780 = vmatprep.mubr.bf16.mxu0 %v584
    %1781 = vmatmul.mubr.bf16.gmra.mrb[0].mxu0 %v583
    %v1782 = vpop.f32.mrb[0].mxu0
    %v1783 = vadd.f32 %v1670, %v1782
    %v1784 = vpop.f32.mrb[0].mxu0
    %v1785 = vadd.f32 %v1672, %v1784
    %v1786 = vpop.f32.mrb[0].mxu0
    %v1787 = vadd.f32 %v1674, %v1786
    %v1788 = vpop.f32.mrb[0].mxu0
    %v1789 = vadd.f32 %v1676, %v1788
    %1790 = vmatprep.mubr.bf16.mxu0 %v588
    %1791 = vmatmul.mubr.bf16.gmra.mrb[0].mxu0 %v587
    %v1792 = vpop.f32.mrb[0].mxu0
    %v1793 = vadd.f32 %v1680, %v1792
    %v1794 = vpop.f32.mrb[0].mxu0
    %v1795 = vadd.f32 %v1682, %v1794
    %v1796 = vpop.f32.mrb[0].mxu0
    %v1797 = vadd.f32 %v1684, %v1796
    %v1798 = vpop.f32.mrb[0].mxu0
    %v1799 = vadd.f32 %v1686, %v1798
    %1800 = vmatprep.mubr.bf16.mxu0 %v592
    %1801 = vmatmul.mubr.bf16.gmra.mrb[0].mxu0 %v591
    %v1802 = vpop.f32.mrb[0].mxu0
    %v1803 = vadd.f32 %v1690, %v1802
    %v1804 = vpop.f32.mrb[0].mxu0
    %v1805 = vadd.f32 %v1692, %v1804
    %v1806 = vpop.f32.mrb[0].mxu0
    %v1807 = vadd.f32 %v1694, %v1806
    %v1808 = vpop.f32.mrb[0].mxu0
    %v1809 = vadd.f32 %v1696, %v1808
    %1810 = vmatprep.mubr.bf16.mxu0 %v596
    %1811 = vmatmul.mubr.bf16.gmra.mrb[0].mxu0 %v595
    %v1812 = vpop.f32.mrb[0].mxu0
    %v1813 = vadd.f32 %v1700, %v1812
    %v1814 = vpop.f32.mrb[0].mxu0
    %v1815 = vadd.f32 %v1702, %v1814
    %v1816 = vpop.f32.mrb[0].mxu0
    %v1817 = vadd.f32 %v1704, %v1816
    %v1818 = vpop.f32.mrb[0].mxu0
    %v1819 = vadd.f32 %v1706, %v1818
    %1820 = vmatprep.mubr.bf16.mxu0 %v600
    %1821 = vmatmul.mubr.bf16.gmra.mrb[0].mxu0 %v599
    %v1822 = vpop.f32.mrb[0].mxu0
    %v1823 = vadd.f32 %v1710, %v1822
    %v1824 = vpop.f32.mrb[0].mxu0
    %v1825 = vadd.f32 %v1712, %v1824
    %v1826 = vpop.f32.mrb[0].mxu0
    %v1827 = vadd.f32 %v1714, %v1826
    %v1828 = vpop.f32.mrb[0].mxu0
    %v1829 = vadd.f32 %v1716, %v1828
    %1830 = vmatprep.mubr.bf16.mxu0 %v604
    %1831 = vmatmul.mubr.bf16.gmra.mrb[0].mxu0 %v603
    %v1832 = vpop.f32.mrb[0].mxu0
    %v1833 = vadd.f32 %v1720, %v1832
    %v1834 = vpop.f32.mrb[0].mxu0
    %v1835 = vadd.f32 %v1722, %v1834
    %v1836 = vpop.f32.mrb[0].mxu0
    %v1837 = vadd.f32 %v1724, %v1836
    %v1838 = vpop.f32.mrb[0].mxu0
    %v1839 = vadd.f32 %v1726, %v1838
    %1840 = vmatprep.mubr.bf16.mxu0 %v608
    %1841 = vmatmul.mubr.bf16.gmra.mrb[0].mxu0 %v607
    %v1842 = vpop.f32.mrb[0].mxu0
    %v1843 = vadd.f32 %v1730, %v1842
    %v1844 = vpop.f32.mrb[0].mxu0
    %v1845 = vadd.f32 %v1732, %v1844
    %v1846 = vpop.f32.mrb[0].mxu0
    %v1847 = vadd.f32 %v1734, %v1846
    %v1848 = vpop.f32.mrb[0].mxu0
    %v1849 = vadd.f32 %v1736, %v1848
    %1850 = vdwg.mxu0
    %v1851 = vmul.f32 %v1547, %v1547
    %v1852 = vmul.f32 %v1549, %v1549
    %v1853 = vmul.f32 %v1773, %v1773
    %v1854 = vmul.f32 %v1775, %v1775
    %v1855 = vmul.f32 %v1551, %v1551
    %v1856 = vmul.f32 %v1553, %v1553
    %v1857 = vmul.f32 %v1777, %v1777
    %v1858 = vmul.f32 %v1779, %v1779
    %v1859 = vmul.f32 %v1557, %v1557
    %v1860 = vmul.f32 %v1559, %v1559
    %v1861 = vmul.f32 %v1783, %v1783
    %v1862 = vmul.f32 %v1785, %v1785
    %v1863 = vmul.f32 %v1561, %v1561
    %v1864 = vmul.f32 %v1563, %v1563
    %v1865 = vmul.f32 %v1787, %v1787
    %v1866 = vmul.f32 %v1789, %v1789
    %v1867 = vmul.f32 %v1567, %v1567
    %v1868 = vmul.f32 %v1569, %v1569
    %v1869 = vmul.f32 %v1793, %v1793
    %v1870 = vmul.f32 %v1795, %v1795
    %v1871 = vmul.f32 %v1571, %v1571
    %v1872 = vmul.f32 %v1573, %v1573
    %v1873 = vmul.f32 %v1797, %v1797
    %v1874 = vmul.f32 %v1799, %v1799
    %v1875 = vmul.f32 %v1577, %v1577
    %v1876 = vmul.f32 %v1579, %v1579
    %v1877 = vmul.f32 %v1803, %v1803
    %v1878 = vmul.f32 %v1805, %v1805
    %v1879 = vmul.f32 %v1581, %v1581
    %v1880 = vmul.f32 %v1583, %v1583
    %v1881 = vmul.f32 %v1807, %v1807
    %v1882 = vmul.f32 %v1809, %v1809
    %v1883 = vmul.f32 %v1587, %v1587
    %v1884 = vmul.f32 %v1589, %v1589
    %v1885 = vmul.f32 %v1813, %v1813
    %v1886 = vmul.f32 %v1815, %v1815
    %v1887 = vmul.f32 %v1591, %v1591
    %v1888 = vmul.f32 %v1593, %v1593
    %v1889 = vmul.f32 %v1817, %v1817
    %v1890 = vmul.f32 %v1819, %v1819
    %v1891 = vmul.f32 %v1597, %v1597
    %v1892 = vmul.f32 %v1599, %v1599
    %v1893 = vmul.f32 %v1823, %v1823
    %v1894 = vmul.f32 %v1825, %v1825
    %v1895 = vmul.f32 %v1601, %v1601
    %v1896 = vmul.f32 %v1603, %v1603
    %v1897 = vmul.f32 %v1827, %v1827
    %v1898 = vmul.f32 %v1829, %v1829
    %v1899 = vmul.f32 %v1607, %v1607
    %v1900 = vmul.f32 %v1609, %v1609
    %v1901 = vmul.f32 %v1833, %v1833
    %v1902 = vmul.f32 %v1835, %v1835
    %v1903 = vmul.f32 %v1611, %v1611
    %v1904 = vmul.f32 %v1613, %v1613
    %v1905 = vmul.f32 %v1837, %v1837
    %v1906 = vmul.f32 %v1839, %v1839
    %v1907 = vmul.f32 %v1617, %v1617
    %v1908 = vmul.f32 %v1619, %v1619
    %v1909 = vmul.f32 %v1843, %v1843
    %v1910 = vmul.f32 %v1845, %v1845
    %v1911 = vmul.f32 %v1621, %v1621
    %v1912 = vmul.f32 %v1623, %v1623
    %v1913 = vmul.f32 %v1847, %v1847
    %v1914 = vmul.f32 %v1849, %v1849
    %v1915 = vadd.f32 %v1851, %v1852
    %v1916 = vadd.f32 %v1915, %v1853
    %v1917 = vadd.f32 %v1916, %v1854
    %1918 = vadd.xlane.f32.xlu0 %v1917
    %v1919 = vpop.xlane.xlu0 %1918
    %v1920 = vadd.f32 %v1855, %v1856
    %v1921 = vadd.f32 %v1920, %v1857
    %v1922 = vadd.f32 %v1921, %v1858
    %1923 = vadd.xlane.f32.xlu0 %v1922
    %v1924 = vpop.xlane.xlu0 %1923
    %v1925 = vadd.f32 %v1859, %v1860
    %v1926 = vadd.f32 %v1925, %v1861
    %v1927 = vadd.f32 %v1926, %v1862
    %1928 = vadd.xlane.f32.xlu0 %v1927
    %v1929 = vpop.xlane.xlu0 %1928
    %v1930 = vadd.f32 %v1863, %v1864
    %v1931 = vadd.f32 %v1930, %v1865
    %v1932 = vadd.f32 %v1931, %v1866
    %1933 = vadd.xlane.f32.xlu0 %v1932
    %v1934 = vpop.xlane.xlu0 %1933
    %v1935 = vadd.f32 %v1867, %v1868
    %v1936 = vadd.f32 %v1935, %v1869
    %v1937 = vadd.f32 %v1936, %v1870
    %1938 = vadd.xlane.f32.xlu0 %v1937
    %v1939 = vpop.xlane.xlu0 %1938
    %v1940 = vadd.f32 %v1871, %v1872
    %v1941 = vadd.f32 %v1940, %v1873
    %v1942 = vadd.f32 %v1941, %v1874
    %1943 = vadd.xlane.f32.xlu0 %v1942
    %v1944 = vpop.xlane.xlu0 %1943
    %v1945 = vadd.f32 %v1875, %v1876
    %v1946 = vadd.f32 %v1945, %v1877
    %v1947 = vadd.f32 %v1946, %v1878
    %1948 = vadd.xlane.f32.xlu0 %v1947
    %v1949 = vpop.xlane.xlu0 %1948
    %v1950 = vadd.f32 %v1879, %v1880
    %v1951 = vadd.f32 %v1950, %v1881
    %v1952 = vadd.f32 %v1951, %v1882
    %1953 = vadd.xlane.f32.xlu0 %v1952
    %v1954 = vpop.xlane.xlu0 %1953
    %v1955 = vadd.f32 %v1883, %v1884
    %v1956 = vadd.f32 %v1955, %v1885
    %v1957 = vadd.f32 %v1956, %v1886
    %1958 = vadd.xlane.f32.xlu0 %v1957
    %v1959 = vpop.xlane.xlu0 %1958
    %v1960 = vadd.f32 %v1887, %v1888
    %v1961 = vadd.f32 %v1960, %v1889
    %v1962 = vadd.f32 %v1961, %v1890
    %1963 = vadd.xlane.f32.xlu0 %v1962
    %v1964 = vpop.xlane.xlu0 %1963
    %v1965 = vadd.f32 %v1891, %v1892
    %v1966 = vadd.f32 %v1965, %v1893
    %v1967 = vadd.f32 %v1966, %v1894
    %1968 = vadd.xlane.f32.xlu0 %v1967
    %v1969 = vpop.xlane.xlu0 %1968
    %v1970 = vadd.f32 %v1895, %v1896
    %v1971 = vadd.f32 %v1970, %v1897
    %v1972 = vadd.f32 %v1971, %v1898
    %1973 = vadd.xlane.f32.xlu0 %v1972
    %v1974 = vpop.xlane.xlu0 %1973
    %v1975 = vadd.f32 %v1899, %v1900
    %v1976 = vadd.f32 %v1975, %v1901
    %v1977 = vadd.f32 %v1976, %v1902
    %1978 = vadd.xlane.f32.xlu0 %v1977
    %v1979 = vpop.xlane.xlu0 %1978
    %v1980 = vadd.f32 %v1903, %v1904
    %v1981 = vadd.f32 %v1980, %v1905
    %v1982 = vadd.f32 %v1981, %v1906
    %1983 = vadd.xlane.f32.xlu0 %v1982
    %v1984 = vpop.xlane.xlu0 %1983
    %v1985 = vadd.f32 %v1907, %v1908
    %v1986 = vadd.f32 %v1985, %v1909
    %v1987 = vadd.f32 %v1986, %v1910
    %1988 = vadd.xlane.f32.xlu0 %v1987
    %v1989 = vpop.xlane.xlu0 %1988
    %v1990 = vadd.f32 %v1911, %v1912
    %v1991 = vadd.f32 %v1990, %v1913
    %v1992 = vadd.f32 %v1991, %v1914
    %1993 = vadd.xlane.f32.xlu0 %v1992
    %v1994 = vpop.xlane.xlu0 %1993
    %v1995 = vmax.f32 %v1919, 1e-24
    %v1996 = vmax.f32 %v1924, 1e-24
    %v1997 = vmax.f32 %v1929, 1e-24
    %v1998 = vmax.f32 %v1934, 1e-24
    %v1999 = vmax.f32 %v1939, 1e-24
    %v2000 = vmax.f32 %v1944, 1e-24
    %v2001 = vmax.f32 %v1949, 1e-24
    %v2002 = vmax.f32 %v1954, 1e-24
    %v2003 = vmax.f32 %v1959, 1e-24
    %v2004 = vmax.f32 %v1964, 1e-24
    %v2005 = vmax.f32 %v1969, 1e-24
    %v2006 = vmax.f32 %v1974, 1e-24
    %v2007 = vmax.f32 %v1979, 1e-24
    %v2008 = vmax.f32 %v1984, 1e-24
    %v2009 = vmax.f32 %v1989, 1e-24
    %v2010 = vmax.f32 %v1994, 1e-24
    %v2011 = vrsqrt.pop %v1995
    %v2012 = vrsqrt.pop %v1996
    %v2013 = vrsqrt.pop %v1997
    %v2014 = vrsqrt.pop %v1998
    %v2015 = vrsqrt.pop %v1999
    %v2016 = vrsqrt.pop %v2000
    %v2017 = vrsqrt.pop %v2001
    %v2018 = vrsqrt.pop %v2002
    %v2019 = vrsqrt.pop %v2003
    %v2020 = vrsqrt.pop %v2004
    %v2021 = vrsqrt.pop %v2005
    %v2022 = vrsqrt.pop %v2006
    %v2023 = vrsqrt.pop %v2007
    %v2024 = vrsqrt.pop %v2008
    %v2025 = vrsqrt.pop %v2009
    %v2026 = vrsqrt.pop %v2010
    %v2027 = vmul.f32 %v1547, %v2011
    %v2028 = vmul.f32 %v1549, %v2011
    %v2029 = vmul.f32 %v1773, %v2011
    %v2030 = vmul.f32 %v1775, %v2011
    %v2031 = vmul.f32 %v1551, %v2012
    %v2032 = vmul.f32 %v1553, %v2012
    %v2033 = vmul.f32 %v1777, %v2012
    %v2034 = vmul.f32 %v1779, %v2012
    %v2035 = vmul.f32 %v1557, %v2013
    %v2036 = vmul.f32 %v1559, %v2013
    %v2037 = vmul.f32 %v1783, %v2013
    %v2038 = vmul.f32 %v1785, %v2013
    %v2039 = vmul.f32 %v1561, %v2014
    %v2040 = vmul.f32 %v1563, %v2014
    %v2041 = vmul.f32 %v1787, %v2014
    %v2042 = vmul.f32 %v1789, %v2014
    %v2043 = vmul.f32 %v1567, %v2015
    %v2044 = vmul.f32 %v1569, %v2015
    %v2045 = vmul.f32 %v1793, %v2015
    %v2046 = vmul.f32 %v1795, %v2015
    %v2047 = vmul.f32 %v1571, %v2016
    %v2048 = vmul.f32 %v1573, %v2016
    %v2049 = vmul.f32 %v1797, %v2016
    %v2050 = vmul.f32 %v1799, %v2016
    %v2051 = vmul.f32 %v1577, %v2017
    %v2052 = vmul.f32 %v1579, %v2017
    %v2053 = vmul.f32 %v1803, %v2017
    %v2054 = vmul.f32 %v1805, %v2017
    %v2055 = vmul.f32 %v1581, %v2018
    %v2056 = vmul.f32 %v1583, %v2018
    %v2057 = vmul.f32 %v1807, %v2018
    %v2058 = vmul.f32 %v1809, %v2018
    %v2059 = vmul.f32 %v1587, %v2019
    %v2060 = vmul.f32 %v1589, %v2019
    %v2061 = vmul.f32 %v1813, %v2019
    %v2062 = vmul.f32 %v1815, %v2019
    %v2063 = vmul.f32 %v1591, %v2020
    %v2064 = vmul.f32 %v1593, %v2020
    %v2065 = vmul.f32 %v1817, %v2020
    %v2066 = vmul.f32 %v1819, %v2020
    %v2067 = vmul.f32 %v1597, %v2021
    %v2068 = vmul.f32 %v1599, %v2021
    %v2069 = vmul.f32 %v1823, %v2021
    %v2070 = vmul.f32 %v1825, %v2021
    %v2071 = vmul.f32 %v1601, %v2022
    %v2072 = vmul.f32 %v1603, %v2022
    %v2073 = vmul.f32 %v1827, %v2022
    %v2074 = vmul.f32 %v1829, %v2022
    %v2075 = vmul.f32 %v1607, %v2023
    %v2076 = vmul.f32 %v1609, %v2023
    %v2077 = vmul.f32 %v1833, %v2023
    %v2078 = vmul.f32 %v1835, %v2023
    %v2079 = vmul.f32 %v1611, %v2024
    %v2080 = vmul.f32 %v1613, %v2024
    %v2081 = vmul.f32 %v1837, %v2024
    %v2082 = vmul.f32 %v1839, %v2024
    %v2083 = vmul.f32 %v1617, %v2025
    %v2084 = vmul.f32 %v1619, %v2025
    %v2085 = vmul.f32 %v1843, %v2025
    %v2086 = vmul.f32 %v1845, %v2025
    %v2087 = vmul.f32 %v1621, %v2026
    %v2088 = vmul.f32 %v1623, %v2026
    %v2089 = vmul.f32 %v1847, %v2026
    %v2090 = vmul.f32 %v1849, %v2026
    %2091 = vst [vmem:[%s5] sm:$0xff] %v2027
    %2092 = vst [vmem:[%s5 + $0x8] sm:$0xff] %v2028
    %2093 = vst [vmem:[%s5 + $0x10] sm:$0xff] %v2029
    %2094 = vst [vmem:[%s5 + $0x18] sm:$0xff] %v2030
    %2095 = vst [vmem:[%s5 + $0x20] sm:$0xff] %v2031
    %2096 = vst [vmem:[%s5 + $0x28] sm:$0xff] %v2032
    %2097 = vst [vmem:[%s5 + $0x30] sm:$0xff] %v2033
    %2098 = vst [vmem:[%s5 + $0x38] sm:$0xff] %v2034
    %2099 = vst [vmem:[%s5 + $0x40] sm:$0xff] %v2035
    %2100 = vst [vmem:[%s5 + $0x48] sm:$0xff] %v2036
    %2101 = vst [vmem:[%s5 + $0x50] sm:$0xff] %v2037
    %2102 = vst [vmem:[%s5 + $0x58] sm:$0xff] %v2038
    %2103 = vst [vmem:[%s5 + $0x60] sm:$0xff] %v2039
    %2104 = vst [vmem:[%s5 + $0x68] sm:$0xff] %v2040
    %2105 = vst [vmem:[%s5 + $0x70] sm:$0xff] %v2041
    %2106 = vst [vmem:[%s5 + $0x78] sm:$0xff] %v2042
    %2107 = vst [vmem:[%s5 + $0x80] sm:$0xff] %v2043
    %2108 = vst [vmem:[%s5 + $0x88] sm:$0xff] %v2044
    %2109 = vst [vmem:[%s5 + $0x90] sm:$0xff] %v2045
    %2110 = vst [vmem:[%s5 + $0x98] sm:$0xff] %v2046
    %2111 = vst [vmem:[%s5 + $0xa0] sm:$0xff] %v2047
    %2112 = vst [vmem:[%s5 + $0xa8] sm:$0xff] %v2048
    %2113 = vst [vmem:[%s5 + $0xb0] sm:$0xff] %v2049
    %2114 = vst [vmem:[%s5 + $0xb8] sm:$0xff] %v2050
    %2115 = vst [vmem:[%s5 + $0xc0] sm:$0xff] %v2051
    %2116 = vst [vmem:[%s5 + $0xc8] sm:$0xff] %v2052
    %2117 = vst [vmem:[%s5 + $0xd0] sm:$0xff] %v2053
    %2118 = vst [vmem:[%s5 + $0xd8] sm:$0xff] %v2054
    %2119 = vst [vmem:[%s5 + $0xe0] sm:$0xff] %v2055
    %2120 = vst [vmem:[%s5 + $0xe8] sm:$0xff] %v2056
    %2121 = vst [vmem:[%s5 + $0xf0] sm:$0xff] %v2057
    %2122 = vst [vmem:[%s5 + $0xf8] sm:$0xff] %v2058
    %2123 = vst [vmem:[%s5 + $0x100] sm:$0xff] %v2059
    %2124 = vst [vmem:[%s5 + $0x108] sm:$0xff] %v2060
    %2125 = vst [vmem:[%s5 + $0x110] sm:$0xff] %v2061
    %2126 = vst [vmem:[%s5 + $0x118] sm:$0xff] %v2062
    %2127 = vst [vmem:[%s5 + $0x120] sm:$0xff] %v2063
    %2128 = vst [vmem:[%s5 + $0x128] sm:$0xff] %v2064
    %2129 = vst [vmem:[%s5 + $0x130] sm:$0xff] %v2065
    %2130 = vst [vmem:[%s5 + $0x138] sm:$0xff] %v2066
    %2131 = vst [vmem:[%s5 + $0x140] sm:$0xff] %v2067
    %2132 = vst [vmem:[%s5 + $0x148] sm:$0xff] %v2068
    %2133 = vst [vmem:[%s5 + $0x150] sm:$0xff] %v2069
    %2134 = vst [vmem:[%s5 + $0x158] sm:$0xff] %v2070
    %2135 = vst [vmem:[%s5 + $0x160] sm:$0xff] %v2071
    %2136 = vst [vmem:[%s5 + $0x168] sm:$0xff] %v2072
    %2137 = vst [vmem:[%s5 + $0x170] sm:$0xff] %v2073
    %2138 = vst [vmem:[%s5 + $0x178] sm:$0xff] %v2074
    %2139 = vst [vmem:[%s5 + $0x180] sm:$0xff] %v2075
    %2140 = vst [vmem:[%s5 + $0x188] sm:$0xff] %v2076
    %2141 = vst [vmem:[%s5 + $0x190] sm:$0xff] %v2077
    %2142 = vst [vmem:[%s5 + $0x198] sm:$0xff] %v2078
    %2143 = vst [vmem:[%s5 + $0x1a0] sm:$0xff] %v2079
    %2144 = vst [vmem:[%s5 + $0x1a8] sm:$0xff] %v2080
    %2145 = vst [vmem:[%s5 + $0x1b0] sm:$0xff] %v2081
    %2146 = vst [vmem:[%s5 + $0x1b8] sm:$0xff] %v2082
    %2147 = vst [vmem:[%s5 + $0x1c0] sm:$0xff] %v2083
    %2148 = vst [vmem:[%s5 + $0x1c8] sm:$0xff] %v2084
    %2149 = vst [vmem:[%s5 + $0x1d0] sm:$0xff] %v2085
    %2150 = vst [vmem:[%s5 + $0x1d8] sm:$0xff] %v2086
    %2151 = vst [vmem:[%s5 + $0x1e0] sm:$0xff] %v2087
    %2152 = vst [vmem:[%s5 + $0x1e8] sm:$0xff] %v2088
    %2153 = vst [vmem:[%s5 + $0x1f0] sm:$0xff] %v2089
    %2154 = vst [vmem:[%s5 + $0x1f8] sm:$0xff] %v2090
    // Predicated region
    $region30: #{_fwd.1} parent=1 // pred_check
      _
    $region31: #{_fwd.1} parent=1 // pred_check_branch
      %2156 = sbr.rel (0) target = $region33
    $region32: #{_fwd.1} parent=1 // pred_region
      _
    $region33: #{_fwd.1} parent=1 // pred_fallthru
      _
    // Predicated region
    $region34: #{_fwd.1} parent=1 // pred_check
      _
    $region35: #{_fwd.1} parent=1 // pred_check_branch
      %2158 = sbr.rel (0) target = $region37
    $region36: #{_fwd.1} parent=1 // pred_region
      _
    $region37: #{_fwd.1} parent=1 // pred_fallthru
      _
    %2159 = vsyncpa [#allocation3], 1
    %2160 = vsyncpa [#allocation5], 1

</llo_original>
